<compile_context>
chip_gen: v7x
topology: tpu7x:2x2x1
jax: 0.10.0
libtpu: 0.0.40
codegen_flags: <defaults>
</compile_context>

<pallas_src>
import jax
import jax.numpy as jnp
from jax.experimental import pallas as pl
from jax.experimental.pallas import tpu as pltpu


def _round_up(v, m):
    return ((v + m - 1) // m) * m


def improved_net_kernel(
    x_ref,      # (N, F_pad)        f32  node features (zero-padded cols)
    ea_ref,     # (E, ED_pad)       f32  edge attrs (zero-padded cols)
    src_ref,    # (E, 1)            i32  edge_index[0]  (source nodes)
    aux_ref,    # (1, L1 + L2)      i32  [dst row | pad | batch row | pad]
    Wedge_ref,  # (ED_pad, 3*dim)   f32  [We1 | We2 | We3] (zero-padded rows)
    Wmain_ref,  # (F_pad+2*dim,dim) f32  [Wenc_pad ; Wn1 ; Wn2]
    Whead_ref,  # (dim+8, dim)      f32  [Wh1 (col-padded) ; Wh2^T row ; pad]
    b_ref,      # (1, 7*dim+128)    f32  [benc|be1|be2|be3|bn1|bn2|bh1|bh2|pad]
    out_ref,    # (B, 1)            f32
):
    f32 = jnp.float32
    N = x_ref.shape[0]
    E = ea_ref.shape[0]
    B = out_ref.shape[0]
    DIM = Wmain_ref.shape[1]
    F_pad = Wmain_ref.shape[0] - 2 * DIM
    L1 = _round_up(E, 128)

    # ---- static, tile-aligned slices of the packed parameters ----
    Wenc = Wmain_ref[0:F_pad, :]
    Wn1 = Wmain_ref[F_pad:F_pad + DIM, :]
    Wn2 = Wmain_ref[F_pad + DIM:F_pad + 2 * DIM, :]
    Wh1 = Whead_ref[0:DIM, :]            # (DIM, DIM); cols >= DIM//2 are zero
    wh2 = Whead_ref[DIM:DIM + 1, :]      # (1, DIM);   cols >= DIM//2 are zero

    benc = b_ref[0:1, 0:DIM]
    be_all = b_ref[0:1, DIM:4 * DIM]              # (1, 3*DIM)
    bn1 = b_ref[0:1, 4 * DIM:5 * DIM]
    bn2 = b_ref[0:1, 5 * DIM:6 * DIM]
    bh1 = b_ref[0:1, 6 * DIM:7 * DIM]
    bh2 = b_ref[0:1, 7 * DIM:7 * DIM + 1]         # (1, 1)

    # hoist bias broadcasts reused across the unrolled 3-layer loop
    # (JAX does not CSE broadcast_in_dim).
    bn1_b = jnp.broadcast_to(bn1, (N, DIM))
    bn2_b = jnp.broadcast_to(bn2, (N, DIM))

    # ---- atom encoder: relu(x @ Wenc + benc) ----
    x = jnp.maximum(
        jnp.dot(x_ref[...], Wenc, preferred_element_type=f32) + benc, 0.0)

    # ---- one-hot gather / scatter / pool operators (built once) ----
    # scatter & pool are built already transposed -> plain row-major MXU dots.
    src = src_ref[...]                     # (E, 1)
    dst = aux_ref[0:1, 0:E]                # (1, E)
    batch = aux_ref[0:1, L1:L1 + N]        # (1, N)

    gather_oh = (jax.lax.broadcasted_iota(jnp.int32, (E, N), 1)
                 == src).astype(f32)                        # (E, N)
    scatter_ohT = (jax.lax.broadcasted_iota(jnp.int32, (N, E), 0)
                   == dst).astype(f32)                      # (N, E)
    pool_ohT = (jax.lax.broadcasted_iota(jnp.int32, (B, N), 0)
                == batch).astype(f32)                       # (B, N)

    # ---- fused edge projections for all three convs in ONE matmul ----
    e_emb_all = jnp.dot(ea_ref[...], Wedge_ref[...],
                        preferred_element_type=f32) + be_all   # (E, 3*DIM)

    def gine_conv(x, e_emb):
        # GINEConv (eps=0):
        #   msg_e  = relu(x[src_e] + Lin_edge(edge_attr_e))
        #   aggr_i = sum_{e: dst_e == i} msg_e
        #   out    = relu(nn(x + aggr)),  nn = Linear->ReLU->Linear (shared)
        x_src = jnp.dot(gather_oh, x, preferred_element_type=f32)
        msg = jnp.maximum(x_src + e_emb, 0.0)
        aggr = jnp.dot(scatter_ohT, msg, preferred_element_type=f32)
        h = x + aggr
        h = jnp.maximum(
            jnp.dot(h, Wn1, preferred_element_type=f32) + bn1_b, 0.0)
        h = jnp.dot(h, Wn2, preferred_element_type=f32) + bn2_b
        return jnp.maximum(h, 0.0)   # outer relu from forward()

    x = gine_conv(x, e_emb_all[:, 0:DIM])
    x = gine_conv(x, e_emb_all[:, DIM:2 * DIM])
    x = gine_conv(x, e_emb_all[:, 2 * DIM:3 * DIM])

    # ---- global_add_pool ----
    pooled = jnp.dot(pool_ohT, x, preferred_element_type=f32)   # (B, DIM)

    # ---- head: Linear(dim, dim//2) -> ReLU -> Linear(dim//2, 1) ----
    h = jnp.maximum(
        jnp.dot(pooled, Wh1, preferred_element_type=f32) + bh1, 0.0)  # (B, DIM)
    # final 1-column Linear as a VPU multiply + cross-lane reduce
    out = jnp.sum(h * wh2, axis=-1, keepdims=True) + bh2
    out_ref[...] = out


def improved_net_forward(x, edge_index, edge_attr, batch, params, num_graphs):
    N, F_in = x.shape
    E, ED = edge_attr.shape
    B = num_graphs
    dim = params["Wn1"].shape[0]
    f32 = jnp.float32

    F_pad = max(8, _round_up(F_in, 8))
    ED_pad = max(8, _round_up(ED, 8))
    L1 = _round_up(E, 128)
    L2 = _round_up(N, 128)

    # --- pack activations / indices ---
    x_pad = jnp.zeros((N, F_pad), f32).at[:, :F_in].set(x.astype(f32))
    ea_pad = jnp.zeros((E, ED_pad), f32).at[:, :ED].set(edge_attr.astype(f32))
    src_col = edge_index[0].reshape(E, 1).astype(jnp.int32)
    aux = jnp.zeros((1, L1 + L2), jnp.int32)
    aux = aux.at[0, :E].set(edge_index[1].astype(jnp.int32))
    aux = aux.at[0, L1:L1 + N].set(batch.astype(jnp.int32))

    # --- pack weights (a few big DMAs instead of ~21 tiny ones) ---
    W_edge = jnp.zeros((ED_pad, 3 * dim), f32)
    W_edge = W_edge.at[:ED, 0:dim].set(params["We1"])
    W_edge = W_edge.at[:ED, dim:2 * dim].set(params["We2"])
    W_edge = W_edge.at[:ED, 2 * dim:3 * dim].set(params["We3"])

    W_main = jnp.zeros((F_pad + 2 * dim, dim), f32)
    W_main = W_main.at[:F_in, :].set(params["Wenc"])
    W_main = W_main.at[F_pad:F_pad + dim, :].set(params["Wn1"])
    W_main = W_main.at[F_pad + dim:F_pad + 2 * dim, :].set(params["Wn2"])

    W_head = jnp.zeros((dim + 8, dim), f32)
    W_head = W_head.at[:dim, :dim // 2].set(params["Wh1"])
    W_head = W_head.at[dim, :dim // 2].set(params["Wh2"].reshape(-1))

    b_all = jnp.zeros((1, 7 * dim + 128), f32)
    b_all = b_all.at[0, 0:dim].set(params["benc"].reshape(-1))
    b_all = b_all.at[0, dim:2 * dim].set(params["be1"].reshape(-1))
    b_all = b_all.at[0, 2 * dim:3 * dim].set(params["be2"].reshape(-1))
    b_all = b_all.at[0, 3 * dim:4 * dim].set(params["be3"].reshape(-1))
    b_all = b_all.at[0, 4 * dim:5 * dim].set(params["bn1"].reshape(-1))
    b_all = b_all.at[0, 5 * dim:6 * dim].set(params["bn2"].reshape(-1))
    b_all = b_all.at[0, 6 * dim:6 * dim + dim // 2].set(params["bh1"].reshape(-1))
    b_all = b_all.at[0, 7 * dim].set(params["bh2"].reshape(-1)[0])

    ins = (x_pad, ea_pad, src_col, aux, W_edge, W_main, W_head, b_all)

    vmem = pl.BlockSpec(memory_space=pltpu.MemorySpace.VMEM)

    # Advisory cost estimate so XLA schedules around this micro-kernel sanely.
    flops = (
        2 * N * F_pad * dim                                   # atom encoder
        + 2 * E * ED_pad * 3 * dim                            # fused edge proj
        + 3 * (2 * E * N * dim + 2 * N * E * dim              # gather + scatter
               + 2 * 2 * N * dim * dim)                       # nn (two linears)
        + 2 * B * N * dim                                     # pool
        + 2 * B * dim * dim                                   # head linear 1
        + 2 * B * dim                                         # head reduce
    )
    bytes_accessed = sum(int(a.size) * a.dtype.itemsize for a in ins) + B * 4

    out = pl.pallas_call(
        improved_net_kernel,
        out_shape=jax.ShapeDtypeStruct((B, 1), jnp.float32),
        in_specs=[vmem] * len(ins),
        out_specs=vmem,
        cost_estimate=pl.CostEstimate(
            flops=flops, transcendentals=0, bytes_accessed=bytes_accessed),
    )(*ins)
    return out.reshape(-1)


def init_params(key, num_features=11, edge_dim=4, dim=128):
    ks = jax.random.split(key, 12)

    def lin(k, fan_in, fan_out, scale=0.1):
        kw, kb = jax.random.split(k)
        W = jax.random.normal(kw, (fan_in, fan_out), jnp.float32) * scale
        b = jax.random.normal(kb, (1, fan_out), jnp.float32) * scale
        return W, b

    p = {}
    p["Wenc"], p["benc"] = lin(ks[0], num_features, dim)
    # three independent edge projections (one per GINEConv)
    p["We1"], p["be1"] = lin(ks[1], edge_dim, dim)
    p["We2"], p["be2"] = lin(ks[2], edge_dim, dim)
    p["We3"], p["be3"] = lin(ks[3], edge_dim, dim)
    # the Sequential `nn` is the SAME module for all three convs -> shared weights
    p["Wn1"], p["bn1"] = lin(ks[4], dim, dim)
    p["Wn2"], p["bn2"] = lin(ks[5], dim, dim)
    # head
    p["Wh1"], p["bh1"] = lin(ks[6], dim, dim // 2)
    p["Wh2"], p["bh2"] = lin(ks[7], dim // 2, 1)
    return p


def reference_forward(x, edge_index, edge_attr, batch, p, num_graphs):
    """Pure-JAX reference mirroring the PyTorch/PyG forward."""
    def relu(v):
        return jnp.maximum(v, 0.0)

    h = relu(x @ p["Wenc"] + p["benc"])
    src, dst = edge_index[0], edge_index[1]

    def conv(h, We, be):
        e_emb = edge_attr @ We + be
        msg = relu(h[src] + e_emb)
        aggr = jax.ops.segment_sum(msg, dst, num_segments=h.shape[0])
        z = h + aggr
        z = relu(z @ p["Wn1"] + p["bn1"])
        z = z @ p["Wn2"] + p["bn2"]
        return relu(z)

    h = conv(h, p["We1"], p["be1"])
    h = conv(h, p["We2"], p["be2"])
    h = conv(h, p["We3"], p["be3"])
    pooled = jax.ops.segment_sum(h, batch, num_segments=num_graphs)
    o = relu(pooled @ p["Wh1"] + p["bh1"])
    o = o @ p["Wh2"] + p["bh2"]
    return o.reshape(-1)


if __name__ == "__main__":
    key = jax.random.PRNGKey(0)
    k_x, k_ea, k_src, k_dst, k_p = jax.random.split(key, 5)

    N, E, B = 32, 64, 2
    num_features, edge_dim, dim = 11, 4, 128

    x = jax.random.normal(k_x, (N, num_features), jnp.float32)
    edge_attr = jax.random.normal(k_ea, (E, edge_dim), jnp.float32)
    src = jax.random.randint(k_src, (E,), 0, N, jnp.int32)
    dst = jax.random.randint(k_dst, (E,), 0, N, jnp.int32)
    edge_index = jnp.stack([src, dst], axis=0)
    batch = jnp.concatenate(
        [jnp.zeros((N // 2,), jnp.int32), jnp.ones((N - N // 2,), jnp.int32)]
    )

    params = init_params(k_p, num_features, edge_dim, dim)

    out = improved_net_forward(x, edge_index, edge_attr, batch, params, B)
    out = jax.block_until_ready(out)

    ref = reference_forward(x, edge_index, edge_attr, batch, params, B)
    assert out.shape == (B,)
    assert jnp.allclose(out, ref, atol=1e-3, rtol=1e-3), (out, ref)

    print("KERNEL_OK")
</pallas_src>

<mosaic_0001>
module attributes {stable_mosaic.version = 11 : i64} {
  func.func @improved_net_kernel(%arg0: memref<32x16xf32, #tpu.memory_space<vmem>>, %arg1: memref<64x8xf32, #tpu.memory_space<vmem>>, %arg2: memref<64x1xi32, #tpu.memory_space<vmem>>, %arg3: memref<1x256xi32, #tpu.memory_space<vmem>>, %arg4: memref<8x384xf32, #tpu.memory_space<vmem>>, %arg5: memref<272x128xf32, #tpu.memory_space<vmem>>, %arg6: memref<136x128xf32, #tpu.memory_space<vmem>>, %arg7: memref<1x1024xf32, #tpu.memory_space<vmem>>, %arg8: memref<2x1xf32, #tpu.memory_space<vmem>>) attributes {dimension_semantics = [], scalar_prefetch = 0 : i64, scratch_operands = 0 : i64, tpu.core_type = #tpu.core_type<tc>} {
    %c0 = arith.constant 0 : index
    %c0_0 = arith.constant 0 : index
    %0 = vector.load %arg5[%c0, %c0_0] : memref<272x128xf32, #tpu.memory_space<vmem>>, vector<16x128xf32>
    %c16 = arith.constant 16 : index
    %c0_1 = arith.constant 0 : index
    %1 = vector.load %arg5[%c16, %c0_1] : memref<272x128xf32, #tpu.memory_space<vmem>>, vector<128x128xf32>
    %c144 = arith.constant 144 : index
    %c0_2 = arith.constant 0 : index
    %2 = vector.load %arg5[%c144, %c0_2] : memref<272x128xf32, #tpu.memory_space<vmem>>, vector<128x128xf32>
    %c0_3 = arith.constant 0 : index
    %c0_4 = arith.constant 0 : index
    %3 = vector.load %arg6[%c0_3, %c0_4] : memref<136x128xf32, #tpu.memory_space<vmem>>, vector<128x128xf32>
    %c128 = arith.constant 128 : index
    %c0_5 = arith.constant 0 : index
    %4 = vector.load %arg6[%c128, %c0_5] : memref<136x128xf32, #tpu.memory_space<vmem>>, vector<1x128xf32>
    %c0_6 = arith.constant 0 : index
    %c0_7 = arith.constant 0 : index
    %5 = vector.load %arg7[%c0_6, %c0_7] : memref<1x1024xf32, #tpu.memory_space<vmem>>, vector<1x128xf32>
    %c0_8 = arith.constant 0 : index
    %c128_9 = arith.constant 128 : index
    %6 = vector.load %arg7[%c0_8, %c128_9] : memref<1x1024xf32, #tpu.memory_space<vmem>>, vector<1x384xf32>
    %c0_10 = arith.constant 0 : index
    %c512 = arith.constant 512 : index
    %7 = vector.load %arg7[%c0_10, %c512] : memref<1x1024xf32, #tpu.memory_space<vmem>>, vector<1x128xf32>
    %c0_11 = arith.constant 0 : index
    %c640 = arith.constant 640 : index
    %8 = vector.load %arg7[%c0_11, %c640] : memref<1x1024xf32, #tpu.memory_space<vmem>>, vector<1x128xf32>
    %c0_12 = arith.constant 0 : index
    %c768 = arith.constant 768 : index
    %9 = vector.load %arg7[%c0_12, %c768] : memref<1x1024xf32, #tpu.memory_space<vmem>>, vector<1x128xf32>
    %c0_13 = arith.constant 0 : index
    %c896 = arith.constant 896 : index
    %10 = vector.load %arg7[%c0_13, %c896] : memref<1x1024xf32, #tpu.memory_space<vmem>>, vector<1x1xf32>
    %11 = vector.shape_cast %7 : vector<1x128xf32> to vector<1x128xf32>
    %12 = vector.broadcast %11 : vector<1x128xf32> to vector<32x128xf32>
    %13 = vector.shape_cast %8 : vector<1x128xf32> to vector<1x128xf32>
    %14 = vector.broadcast %13 : vector<1x128xf32> to vector<32x128xf32>
    %c0_14 = arith.constant 0 : index
    %c0_15 = arith.constant 0 : index
    %15 = vector.load %arg0[%c0_14, %c0_15] : memref<32x16xf32, #tpu.memory_space<vmem>>, vector<32x16xf32>
    %cst = arith.constant dense<0.000000e+00> : vector<32x128xf32>
    %16 = tpu.matmul %15, %0, %cst {dimension_numbers = #tpu.dot_dimension_numbers<[1], [0], [0], [1], [0, 0, 1, 1], [], []>} : vector<32x16xf32>, vector<16x128xf32>, vector<32x128xf32> -> vector<32x128xf32>
    %17 = vector.broadcast %5 : vector<1x128xf32> to vector<32x128xf32>
    %18 = arith.addf %16, %17 : vector<32x128xf32>
    %cst_16 = arith.constant 0.000000e+00 : f32
    %19 = vector.broadcast %cst_16 : f32 to vector<32x128xf32>
    %20 = arith.maximumf %18, %19 : vector<32x128xf32>
    %c0_17 = arith.constant 0 : index
    %c0_18 = arith.constant 0 : index
    %21 = vector.load %arg2[%c0_17, %c0_18] : memref<64x1xi32, #tpu.memory_space<vmem>>, vector<64x1xi32>
    %c0_19 = arith.constant 0 : index
    %c0_20 = arith.constant 0 : index
    %22 = vector.load %arg3[%c0_19, %c0_20] : memref<1x256xi32, #tpu.memory_space<vmem>>, vector<1x64xi32>
    %c0_21 = arith.constant 0 : index
    %c128_22 = arith.constant 128 : index
    %23 = vector.load %arg3[%c0_21, %c128_22] : memref<1x256xi32, #tpu.memory_space<vmem>>, vector<1x32xi32>
    %24 = tpu.iota {dimensions = array<i32: 1>} : vector<64x32xi32>
    %25 = vector.broadcast %21 : vector<64x1xi32> to vector<64x32xi32>
    %26 = arith.cmpi eq, %24, %25 : vector<64x32xi32>
    %27 = arith.extui %26 : vector<64x32xi1> to vector<64x32xi32>
    %28 = arith.sitofp %27 : vector<64x32xi32> to vector<64x32xf32>
    %29 = tpu.iota {dimensions = array<i32: 0>} : vector<32x64xi32>
    %30 = vector.broadcast %22 : vector<1x64xi32> to vector<32x64xi32>
    %31 = arith.cmpi eq, %29, %30 : vector<32x64xi32>
    %32 = arith.extui %31 : vector<32x64xi1> to vector<32x64xi32>
    %33 = arith.sitofp %32 : vector<32x64xi32> to vector<32x64xf32>
    %34 = tpu.iota {dimensions = array<i32: 0>} : vector<2x32xi32>
    %35 = vector.broadcast %23 : vector<1x32xi32> to vector<2x32xi32>
    %36 = arith.cmpi eq, %34, %35 : vector<2x32xi32>
    %37 = arith.extui %36 : vector<2x32xi1> to vector<2x32xi32>
    %38 = arith.sitofp %37 : vector<2x32xi32> to vector<2x32xf32>
    %c0_23 = arith.constant 0 : index
    %c0_24 = arith.constant 0 : index
    %39 = vector.load %arg1[%c0_23, %c0_24] : memref<64x8xf32, #tpu.memory_space<vmem>>, vector<64x8xf32>
    %c0_25 = arith.constant 0 : index
    %c0_26 = arith.constant 0 : index
    %40 = vector.load %arg4[%c0_25, %c0_26] : memref<8x384xf32, #tpu.memory_space<vmem>>, vector<8x384xf32>
    %cst_27 = arith.constant dense<0.000000e+00> : vector<64x384xf32>
    %41 = tpu.matmul %39, %40, %cst_27 {dimension_numbers = #tpu.dot_dimension_numbers<[1], [0], [0], [1], [0, 0, 1, 1], [], []>} : vector<64x8xf32>, vector<8x384xf32>, vector<64x384xf32> -> vector<64x384xf32>
    %42 = vector.broadcast %6 : vector<1x384xf32> to vector<64x384xf32>
    %43 = arith.addf %41, %42 : vector<64x384xf32>
    %44 = vector.extract_strided_slice %43 {offsets = [0, 0], sizes = [64, 128], strides = [1, 1]} : vector<64x384xf32> to vector<64x128xf32>
    %cst_28 = arith.constant dense<0.000000e+00> : vector<64x128xf32>
    %45 = tpu.matmul %28, %20, %cst_28 {dimension_numbers = #tpu.dot_dimension_numbers<[1], [0], [0], [1], [0, 0, 1, 1], [], []>} : vector<64x32xf32>, vector<32x128xf32>, vector<64x128xf32> -> vector<64x128xf32>
    %46 = arith.addf %45, %44 : vector<64x128xf32>
    %cst_29 = arith.constant 0.000000e+00 : f32
    %47 = vector.broadcast %cst_29 : f32 to vector<64x128xf32>
    %48 = arith.maximumf %46, %47 : vector<64x128xf32>
    %cst_30 = arith.constant dense<0.000000e+00> : vector<32x128xf32>
    %49 = tpu.matmul %33, %48, %cst_30 {dimension_numbers = #tpu.dot_dimension_numbers<[1], [0], [0], [1], [0, 0, 1, 1], [], []>} : vector<32x64xf32>, vector<64x128xf32>, vector<32x128xf32> -> vector<32x128xf32>
    %50 = arith.addf %20, %49 : vector<32x128xf32>
    %cst_31 = arith.constant dense<0.000000e+00> : vector<32x128xf32>
    %51 = tpu.matmul %50, %1, %cst_31 {dimension_numbers = #tpu.dot_dimension_numbers<[1], [0], [0], [1], [0, 0, 1, 1], [], []>} : vector<32x128xf32>, vector<128x128xf32>, vector<32x128xf32> -> vector<32x128xf32>
    %52 = arith.addf %51, %12 : vector<32x128xf32>
    %cst_32 = arith.constant 0.000000e+00 : f32
    %53 = vector.broadcast %cst_32 : f32 to vector<32x128xf32>
    %54 = arith.maximumf %52, %53 : vector<32x128xf32>
    %cst_33 = arith.constant dense<0.000000e+00> : vector<32x128xf32>
    %55 = tpu.matmul %54, %2, %cst_33 {dimension_numbers = #tpu.dot_dimension_numbers<[1], [0], [0], [1], [0, 0, 1, 1], [], []>} : vector<32x128xf32>, vector<128x128xf32>, vector<32x128xf32> -> vector<32x128xf32>
    %56 = arith.addf %55, %14 : vector<32x128xf32>
    %cst_34 = arith.constant 0.000000e+00 : f32
    %57 = vector.broadcast %cst_34 : f32 to vector<32x128xf32>
    %58 = arith.maximumf %56, %57 : vector<32x128xf32>
    %59 = vector.extract_strided_slice %43 {offsets = [0, 128], sizes = [64, 128], strides = [1, 1]} : vector<64x384xf32> to vector<64x128xf32>
    %cst_35 = arith.constant dense<0.000000e+00> : vector<64x128xf32>
    %60 = tpu.matmul %28, %58, %cst_35 {dimension_numbers = #tpu.dot_dimension_numbers<[1], [0], [0], [1], [0, 0, 1, 1], [], []>} : vector<64x32xf32>, vector<32x128xf32>, vector<64x128xf32> -> vector<64x128xf32>
    %61 = arith.addf %60, %59 : vector<64x128xf32>
    %cst_36 = arith.constant 0.000000e+00 : f32
    %62 = vector.broadcast %cst_36 : f32 to vector<64x128xf32>
    %63 = arith.maximumf %61, %62 : vector<64x128xf32>
    %cst_37 = arith.constant dense<0.000000e+00> : vector<32x128xf32>
    %64 = tpu.matmul %33, %63, %cst_37 {dimension_numbers = #tpu.dot_dimension_numbers<[1], [0], [0], [1], [0, 0, 1, 1], [], []>} : vector<32x64xf32>, vector<64x128xf32>, vector<32x128xf32> -> vector<32x128xf32>
    %65 = arith.addf %58, %64 : vector<32x128xf32>
    %cst_38 = arith.constant dense<0.000000e+00> : vector<32x128xf32>
    %66 = tpu.matmul %65, %1, %cst_38 {dimension_numbers = #tpu.dot_dimension_numbers<[1], [0], [0], [1], [0, 0, 1, 1], [], []>} : vector<32x128xf32>, vector<128x128xf32>, vector<32x128xf32> -> vector<32x128xf32>
    %67 = arith.addf %66, %12 : vector<32x128xf32>
    %cst_39 = arith.constant 0.000000e+00 : f32
    %68 = vector.broadcast %cst_39 : f32 to vector<32x128xf32>
    %69 = arith.maximumf %67, %68 : vector<32x128xf32>
    %cst_40 = arith.constant dense<0.000000e+00> : vector<32x128xf32>
    %70 = tpu.matmul %69, %2, %cst_40 {dimension_numbers = #tpu.dot_dimension_numbers<[1], [0], [0], [1], [0, 0, 1, 1], [], []>} : vector<32x128xf32>, vector<128x128xf32>, vector<32x128xf32> -> vector<32x128xf32>
    %71 = arith.addf %70, %14 : vector<32x128xf32>
    %cst_41 = arith.constant 0.000000e+00 : f32
    %72 = vector.broadcast %cst_41 : f32 to vector<32x128xf32>
    %73 = arith.maximumf %71, %72 : vector<32x128xf32>
    %74 = vector.extract_strided_slice %43 {offsets = [0, 256], sizes = [64, 128], strides = [1, 1]} : vector<64x384xf32> to vector<64x128xf32>
    %cst_42 = arith.constant dense<0.000000e+00> : vector<64x128xf32>
    %75 = tpu.matmul %28, %73, %cst_42 {dimension_numbers = #tpu.dot_dimension_numbers<[1], [0], [0], [1], [0, 0, 1, 1], [], []>} : vector<64x32xf32>, vector<32x128xf32>, vector<64x128xf32> -> vector<64x128xf32>
    %76 = arith.addf %75, %74 : vector<64x128xf32>
    %cst_43 = arith.constant 0.000000e+00 : f32
    %77 = vector.broadcast %cst_43 : f32 to vector<64x128xf32>
    %78 = arith.maximumf %76, %77 : vector<64x128xf32>
    %cst_44 = arith.constant dense<0.000000e+00> : vector<32x128xf32>
    %79 = tpu.matmul %33, %78, %cst_44 {dimension_numbers = #tpu.dot_dimension_numbers<[1], [0], [0], [1], [0, 0, 1, 1], [], []>} : vector<32x64xf32>, vector<64x128xf32>, vector<32x128xf32> -> vector<32x128xf32>
    %80 = arith.addf %73, %79 : vector<32x128xf32>
    %cst_45 = arith.constant dense<0.000000e+00> : vector<32x128xf32>
    %81 = tpu.matmul %80, %1, %cst_45 {dimension_numbers = #tpu.dot_dimension_numbers<[1], [0], [0], [1], [0, 0, 1, 1], [], []>} : vector<32x128xf32>, vector<128x128xf32>, vector<32x128xf32> -> vector<32x128xf32>
    %82 = arith.addf %81, %12 : vector<32x128xf32>
    %cst_46 = arith.constant 0.000000e+00 : f32
    %83 = vector.broadcast %cst_46 : f32 to vector<32x128xf32>
    %84 = arith.maximumf %82, %83 : vector<32x128xf32>
    %cst_47 = arith.constant dense<0.000000e+00> : vector<32x128xf32>
    %85 = tpu.matmul %84, %2, %cst_47 {dimension_numbers = #tpu.dot_dimension_numbers<[1], [0], [0], [1], [0, 0, 1, 1], [], []>} : vector<32x128xf32>, vector<128x128xf32>, vector<32x128xf32> -> vector<32x128xf32>
    %86 = arith.addf %85, %14 : vector<32x128xf32>
    %cst_48 = arith.constant 0.000000e+00 : f32
    %87 = vector.broadcast %cst_48 : f32 to vector<32x128xf32>
    %88 = arith.maximumf %86, %87 : vector<32x128xf32>
    %cst_49 = arith.constant dense<0.000000e+00> : vector<2x128xf32>
    %89 = tpu.matmul %38, %88, %cst_49 {dimension_numbers = #tpu.dot_dimension_numbers<[1], [0], [0], [1], [0, 0, 1, 1], [], []>} : vector<2x32xf32>, vector<32x128xf32>, vector<2x128xf32> -> vector<2x128xf32>
    %cst_50 = arith.constant dense<0.000000e+00> : vector<2x128xf32>
    %90 = tpu.matmul %89, %3, %cst_50 {dimension_numbers = #tpu.dot_dimension_numbers<[1], [0], [0], [1], [0, 0, 1, 1], [], []>} : vector<2x128xf32>, vector<128x128xf32>, vector<2x128xf32> -> vector<2x128xf32>
    %91 = vector.broadcast %9 : vector<1x128xf32> to vector<2x128xf32>
    %92 = arith.addf %90, %91 : vector<2x128xf32>
    %cst_51 = arith.constant 0.000000e+00 : f32
    %93 = vector.broadcast %cst_51 : f32 to vector<2x128xf32>
    %94 = arith.maximumf %92, %93 : vector<2x128xf32>
    %95 = vector.broadcast %4 : vector<1x128xf32> to vector<2x128xf32>
    %96 = arith.mulf %94, %95 : vector<2x128xf32>
    %cst_52 = arith.constant dense<0.000000e+00> : vector<2xf32>
    %97 = vector.multi_reduction <add>, %96, %cst_52 [1] : vector<2x128xf32> to vector<2xf32>
    %98 = vector.shape_cast %97 : vector<2xf32> to vector<2x1xf32>
    %99 = vector.broadcast %10 : vector<1x1xf32> to vector<2x1xf32>
    %100 = arith.addf %98, %99 : vector<2x1xf32>
    %c0_53 = arith.constant 0 : index
    %c0_54 = arith.constant 0 : index
    %101 = vector.load %arg8[%c0_53, %c0_54] : memref<2x1xf32, #tpu.memory_space<vmem>>, vector<2x1xf32>
    tpu.vector_store %arg8[%c0_53, %c0_54], %100 {strides = array<i32>} : memref<2x1xf32, #tpu.memory_space<vmem>>, vector<2x1xf32>,
    return
  }
}

</mosaic_0001>

<llo_original>
// kernel: tpu_custom_call.1
$region0: #{tpu_custom_call.1}
  #allocation0 [shape = 'u32[]', space=smem, size = 0x4, offset = 0x4, fixed_abs, tag = 'smem constant byte address 0x4 - core index']
  #allocation1 [shape = 'u32[144,128]{1,0:T(1,128)}', space=vmem, size = 0x12000, scoped, tag = 'internal scratch']
  %s0 = inlined_call_operand.vmem [shape: f32[32,16], index: 0, kind: input, shape index: {}]
  %s1 = inlined_call_operand.vmem [shape: f32[64,8], index: 1, kind: input, shape index: {}]
  %s2 = inlined_call_operand.vmem [shape: s32[64,1], index: 2, kind: input, shape index: {}]
  %s3 = inlined_call_operand.vmem [shape: s32[1,256], index: 3, kind: input, shape index: {}]
  %s4 = inlined_call_operand.vmem [shape: f32[8,384], index: 4, kind: input, shape index: {}]
  %s5 = inlined_call_operand.hbm [shape: f32[272,128], index: 5, kind: input, shape index: {}]
  %s6 = inlined_call_operand.vmem [shape: f32[136,128], index: 6, kind: input, shape index: {}]
  %s7 = inlined_call_operand.vmem [shape: f32[1,1024], index: 7, kind: input, shape index: {}]
  %s8 = inlined_call_operand.vmem [shape: f32[2,1], index: 8, kind: output, shape index: {}]
  %s9 = sld [smem:[#allocation0]]
  $region46: #{tpu_custom_call.1} parent=0
    _
  %s11 = ssub.s32 1, %s9
  %s12 = scalar_select 0, %s11, %s9
  $region1: #{tpu_custom_call.1} parent=0
    #allocation2 [shape = 'u8[139264]{0}', space=vmem, size = 0x22000, scoped, tag = 'input window, operand 5, single buffered']
    #allocation3 [shape = 's32[1]{0}', space=sflag, size = 0x4, scoped, tag = 'scoped memory for tpu_custom_call.1']
    %13 = vsyncpa [#allocation3], 0
    // Predicated region
    $region2: #{tpu_custom_call.1} parent=1 // pred_check
      _
    $region3: #{tpu_custom_call.1} parent=1 // pred_check_branch
      %15 = sbr.rel (0) target = $region5
    $region4: #{tpu_custom_call.1} parent=1 // pred_region
      _
    $region5: #{tpu_custom_call.1} parent=1 // pred_fallthru
      _
    // Predicated region
    $region6: #{tpu_custom_call.1} parent=1 // pred_check
      _
    $region7: #{tpu_custom_call.1} parent=1 // pred_check_branch
      %17 = sbr.rel (0) target = $region9
    $region8: #{tpu_custom_call.1} parent=1 // pred_region
      _
    $region9: #{tpu_custom_call.1} parent=1 // pred_fallthru
      _
    // Predicated region
    $region10: #{tpu_custom_call.1} parent=1 // pred_check
      _
    $region11: #{tpu_custom_call.1} parent=1 // pred_check_branch
      %19 = sbr.rel (0) target = $region13
    $region12: #{tpu_custom_call.1} parent=1 // pred_region
      _
    $region13: #{tpu_custom_call.1} parent=1 // pred_fallthru
      _
    // Predicated region
    $region14: #{tpu_custom_call.1} parent=1 // pred_check
      _
    $region15: #{tpu_custom_call.1} parent=1 // pred_check_branch
      %21 = sbr.rel (0) target = $region17
    $region16: #{tpu_custom_call.1} parent=1 // pred_region
      _
    $region17: #{tpu_custom_call.1} parent=1 // pred_fallthru
      _
    // Predicated region
    $region18: #{tpu_custom_call.1} parent=1 // pred_check
      _
    $region19: #{tpu_custom_call.1} parent=1 // pred_check_branch
      %23 = sbr.rel (0) target = $region21
    $region20: #{tpu_custom_call.1} parent=1 // pred_region
      _
    $region21: #{tpu_custom_call.1} parent=1 // pred_fallthru
      _
    // Predicated region
    $region22: #{tpu_custom_call.1} parent=1 // pred_check
      _
    $region23: #{tpu_custom_call.1} parent=1 // pred_check_branch
      %25 = sbr.rel (0) target = $region25
    $region24: #{tpu_custom_call.1} parent=1 // pred_region
      %s27 = ssub.s32 4352, 4352
      %28 = vsyncadd [#allocation3], %s27
      %s29 = sshll.u32 [#allocation2], 4
      %s30 = int_to_ptr.vmem [resolvable:$true] %s29
      %35 = dma.hbm_to_vmem [thread:$0]  %s5, 4352, %s30, [#allocation3], 128, 128, 8
    $region25: #{tpu_custom_call.1} parent=1 // pred_fallthru
      _
    // Predicated region
    $region26: #{tpu_custom_call.1} parent=1 // pred_check
      _
    $region27: #{tpu_custom_call.1} parent=1 // pred_check_branch
      %37 = sbr.rel (0) target = $region29
    $region28: #{tpu_custom_call.1} parent=1 // pred_region
      _
    $region29: #{tpu_custom_call.1} parent=1 // pred_fallthru
      _
    // Predicated region
    $region30: #{tpu_custom_call.1} parent=1 // pred_check
      _
    $region31: #{tpu_custom_call.1} parent=1 // pred_check_branch
      %39 = sbr.rel (0) target = $region33
    $region32: #{tpu_custom_call.1} parent=1 // pred_region
      _
    $region33: #{tpu_custom_call.1} parent=1 // pred_fallthru
      _
    // Predicated region
    $region34: #{tpu_custom_call.1} parent=1 // pred_check
      _
    $region35: #{tpu_custom_call.1} parent=1 // pred_check_branch
      %41 = sbr.rel (0) target = $region37
    $region36: #{tpu_custom_call.1} parent=1 // pred_region
      %42 = dma.done [#allocation3], 4352
    $region37: #{tpu_custom_call.1} parent=1 // pred_fallthru
      _
    %v43 = vld [vmem:[#allocation2] sm:$0xff]
    %v44 = vld [vmem:[#allocation2 + $0x8] sm:$0xff]
    %v45 = vld [vmem:[#allocation2 + $0x10] sm:$0xff]
    %v46 = vld [vmem:[#allocation2 + $0x18] sm:$0xff]
    %v47 = vld [vmem:[#allocation2 + $0x20] sm:$0xff]
    %v48 = vld [vmem:[#allocation2 + $0x28] sm:$0xff]
    %v49 = vld [vmem:[#allocation2 + $0x30] sm:$0xff]
    %v50 = vld [vmem:[#allocation2 + $0x38] sm:$0xff]
    %v51 = vld [vmem:[#allocation2 + $0x40] sm:$0xff]
    %v52 = vld [vmem:[#allocation2 + $0x48] sm:$0xff]
    %v53 = vld [vmem:[#allocation2 + $0x50] sm:$0xff]
    %v54 = vld [vmem:[#allocation2 + $0x58] sm:$0xff]
    %v55 = vld [vmem:[#allocation2 + $0x60] sm:$0xff]
    %v56 = vld [vmem:[#allocation2 + $0x68] sm:$0xff]
    %v57 = vld [vmem:[#allocation2 + $0x70] sm:$0xff]
    %v58 = vld [vmem:[#allocation2 + $0x78] sm:$0xff]
    %v59 = vld [vmem:[#allocation2 + $0x80] sm:$0xff]
    %v60 = vld [vmem:[#allocation2 + $0x88] sm:$0xff]
    %v61 = vld [vmem:[#allocation2 + $0x90] sm:$0xff]
    %v62 = vld [vmem:[#allocation2 + $0x98] sm:$0xff]
    %v63 = vld [vmem:[#allocation2 + $0xa0] sm:$0xff]
    %v64 = vld [vmem:[#allocation2 + $0xa8] sm:$0xff]
    %v65 = vld [vmem:[#allocation2 + $0xb0] sm:$0xff]
    %v66 = vld [vmem:[#allocation2 + $0xb8] sm:$0xff]
    %v67 = vld [vmem:[#allocation2 + $0xc0] sm:$0xff]
    %v68 = vld [vmem:[#allocation2 + $0xc8] sm:$0xff]
    %v69 = vld [vmem:[#allocation2 + $0xd0] sm:$0xff]
    %v70 = vld [vmem:[#allocation2 + $0xd8] sm:$0xff]
    %v71 = vld [vmem:[#allocation2 + $0xe0] sm:$0xff]
    %v72 = vld [vmem:[#allocation2 + $0xe8] sm:$0xff]
    %v73 = vld [vmem:[#allocation2 + $0xf0] sm:$0xff]
    %v74 = vld [vmem:[#allocation2 + $0xf8] sm:$0xff]
    %v75 = vld [vmem:[#allocation2 + $0x100] sm:$0xff]
    %v76 = vld [vmem:[#allocation2 + $0x108] sm:$0xff]
    %v77 = vld [vmem:[%s6] sm:$0xff]
    %v78 = vld [vmem:[%s6 + $0x8] sm:$0xff]
    %v79 = vld [vmem:[%s6 + $0x10] sm:$0xff]
    %v80 = vld [vmem:[%s6 + $0x18] sm:$0xff]
    %v81 = vld [vmem:[%s6 + $0x20] sm:$0xff]
    %v82 = vld [vmem:[%s6 + $0x28] sm:$0xff]
    %v83 = vld [vmem:[%s6 + $0x30] sm:$0xff]
    %v84 = vld [vmem:[%s6 + $0x38] sm:$0xff]
    %v85 = vld [vmem:[%s6 + $0x40] sm:$0xff]
    %v86 = vld [vmem:[%s6 + $0x48] sm:$0xff]
    %v87 = vld [vmem:[%s6 + $0x50] sm:$0xff]
    %v88 = vld [vmem:[%s6 + $0x58] sm:$0xff]
    %v89 = vld [vmem:[%s6 + $0x60] sm:$0xff]
    %v90 = vld [vmem:[%s6 + $0x68] sm:$0xff]
    %v91 = vld [vmem:[%s6 + $0x70] sm:$0xff]
    %v92 = vld [vmem:[%s6 + $0x78] sm:$0xff]
    %v93 = vld [vmem:[%s6 + $0x80] sm:$0x1]
    %v94 = vld [vmem:[%s7] sm:$0x1]
    %v95 = vld [vmem:[%s7 + $0x1] sm:$0x7]
    %v96 = vld [vmem:[%s7 + $0x4] sm:$0x1]
    %v97 = vld [vmem:[%s7 + $0x5] sm:$0x1]
    %v98 = vld [vmem:[%s7 + $0x6] sm:$0x1]
    %v99 = vld [vmem:[%s7 + $0x7] sm:$0x1]
    %v101 = vlaneseq
    %v102 = vshrl.u32 %v101, 7
    %v103 = vsub.s32 0, %v102
    %v104 = vrot.slane %v96, %v103
    %v107 = vlaneseq
    %v108 = vshrl.u32 %v107, 7
    %v109 = vsub.s32 0, %v108
    %v110 = vrot.slane %v97, %v109
    %v112 = vld [vmem:[%s0] sm:$0xff]
    %v113 = vld [vmem:[%s0 + $0x8] sm:$0xff]
    %v114 = vld [vmem:[%s0 + $0x10] sm:$0xff]
    %v115 = vld [vmem:[%s0 + $0x18] sm:$0xff]
    %v117 = vlaneseq
    %v118 = vshrl.u32 %v117, 7
    %v119 = vsub.s32 0, %v118
    %v120 = vrot.slane %v94, %v119
    %vm122 = vcmask 130048
    %v124 = vsel %vm122, %v112, 0
    %v127 = vsel %vm122, %v113, 0
    %v130 = vsel %vm122, %v114, 0
    %v133 = vsel %vm122, %v115, 0
    %135 = vmatprep.subr.mxu0 0.0
    %136 = vmatpush1.msra.mxu0 %v43
    %137 = vmatprep.subr.mxu0 0.0
    %138 = vmatpush1.msra.mxu0 %v44
    %139 = vmatprep.subr.mxu0 0.0
    %140 = vmatpush1.msra.mxu0 0.0
    %141 = vmatprep.subr.mxu0 0.0
    %142 = vmatpush1.msra.mxu0 0.0
    %143 = vmatprep.subr.mxu0 0.0
    %144 = vmatpush1.msra.mxu0 0.0
    %145 = vmatprep.subr.mxu0 0.0
    %146 = vmatpush1.msra.mxu0 0.0
    %147 = vmatprep.subr.mxu0 0.0
    %148 = vmatpush1.msra.mxu0 0.0
    %149 = vmatprep.subr.mxu0 0.0
    %150 = vmatpush1.msra.mxu0 0.0
    %151 = vmatprep.subr.mxu0 0.0
    %152 = vmatpush1.msra.mxu0 0.0
    %153 = vmatprep.subr.mxu0 0.0
    %154 = vmatpush1.msra.mxu0 0.0
    %155 = vmatprep.subr.mxu0 0.0
    %156 = vmatpush1.msra.mxu0 0.0
    %157 = vmatprep.subr.mxu0 0.0
    %158 = vmatpush1.msra.mxu0 0.0
    %159 = vmatprep.subr.mxu0 0.0
    %160 = vmatpush1.msra.mxu0 0.0
    %161 = vmatprep.subr.mxu0 0.0
    %162 = vmatpush1.msra.mxu0 0.0
    %163 = vmatprep.subr.mxu0 0.0
    %164 = vmatpush1.msra.mxu0 0.0
    %165 = vmatprep.subr.mxu0 0.0
    %166 = vmatpush1.msra.mxu0 0.0
    %167 = vmatprep.subr.mxu0 0.0
    %168 = vmatpush1.msra.mxu0 0.0
    %169 = vmatprep.subr.mxu0 0.0
    %170 = vmatpush1.msra.mxu0 0.0
    %171 = vmatprep.subr.mxu0 0.0
    %172 = vmatpush1.msra.mxu0 0.0
    %173 = vmatprep.subr.mxu0 0.0
    %174 = vmatpush1.msra.mxu0 0.0
    %175 = vmatprep.subr.mxu0 0.0
    %176 = vmatpush1.msra.mxu0 0.0
    %177 = vmatprep.subr.mxu0 0.0
    %178 = vmatpush1.msra.mxu0 0.0
    %179 = vmatprep.subr.mxu0 0.0
    %180 = vmatpush1.msra.mxu0 0.0
    %181 = vmatprep.subr.mxu0 0.0
    %182 = vmatpush1.msra.mxu0 0.0
    %183 = vmatprep.subr.mxu0 0.0
    %184 = vmatpush1.msra.mxu0 0.0
    %185 = vmatprep.subr.mxu0 0.0
    %186 = vmatpush1.msra.mxu0 0.0
    %187 = vmatprep.subr.mxu0 0.0
    %188 = vmatpush1.msra.mxu0 0.0
    %189 = vmatprep.subr.mxu0 0.0
    %190 = vmatpush1.msra.mxu0 0.0
    %191 = vmatprep.subr.mxu0 0.0
    %192 = vmatpush1.msra.mxu0 0.0
    %193 = vmatprep.subr.mxu0 0.0
    %194 = vmatpush1.msra.mxu0 0.0
    %195 = vmatprep.subr.mxu0 0.0
    %196 = vmatpush1.msra.mxu0 0.0
    %197 = vmatprep.subr.mxu0 0.0
    %198 = vmatpush1.msra.mxu0 0.0
    %199 = vmatprep.mubr.f32.mxu0 0.0
    %200 = vmatmul.mubr.f32.gmra.mrb[0].mxu0 %v124
    %v201 = vpop.f32.mrb[0].mxu0
    %v202 = vadd.f32 %v120, %v201
    %v203 = vpop.f32.mrb[0].mxu0
    %204 = vmatprep.mubr.f32.mxu0 0.0
    %205 = vmatmul.mubr.f32.gmra.mrb[0].mxu0 %v127
    %v206 = vpop.f32.mrb[0].mxu0
    %v207 = vadd.f32 %v120, %v206
    %v208 = vpop.f32.mrb[0].mxu0
    %209 = vmatprep.mubr.f32.mxu0 0.0
    %210 = vmatmul.mubr.f32.gmra.mrb[0].mxu0 %v130
    %v211 = vpop.f32.mrb[0].mxu0
    %v212 = vadd.f32 %v120, %v211
    %v213 = vpop.f32.mrb[0].mxu0
    %214 = vmatprep.mubr.f32.mxu0 0.0
    %215 = vmatmul.mubr.f32.gmra.mrb[0].mxu0 %v133
    %v216 = vpop.f32.mrb[0].mxu0
    %v217 = vadd.f32 %v120, %v216
    %v218 = vpop.f32.mrb[0].mxu0
    %219 = vdwg.mxu0
    %v220 = vmax.f32 %v202, 0.0
    %v221 = vmax.f32 %v207, 0.0
    %v222 = vmax.f32 %v212, 0.0
    %v223 = vmax.f32 %v217, 0.0
    %v224 = vld [vmem:[%s2] sm:$0xff]
    %v225 = vld [vmem:[%s2 + $0x8] sm:$0xff]
    %v226 = vld [vmem:[%s2 + $0x10] sm:$0xff]
    %v227 = vld [vmem:[%s2 + $0x18] sm:$0xff]
    %v228 = vld [vmem:[%s2 + $0x20] sm:$0xff]
    %v229 = vld [vmem:[%s2 + $0x28] sm:$0xff]
    %v230 = vld [vmem:[%s2 + $0x30] sm:$0xff]
    %v231 = vld [vmem:[%s2 + $0x38] sm:$0xff]
    %v232 = vld [vmem:[%s3] sm:$0x1]
    %v233 = vld [vmem:[%s3 + $0x1] sm:$0x1]
    %v234 = vlaneseq
    %v235 = vand.u32 %v234, 127
    %236 = vset.pattern.permute.xlu0 0
    %237 = vperm.xlu0 %236, %v224
    %v238 = vpop.permute.xlu0 %237
    %239 = vset.pattern.permute.xlu0 0
    %240 = vperm.xlu0 %239, %v225
    %v241 = vpop.permute.xlu0 %240
    %242 = vset.pattern.permute.xlu0 0
    %243 = vperm.xlu0 %242, %v226
    %v244 = vpop.permute.xlu0 %243
    %245 = vset.pattern.permute.xlu0 0
    %246 = vperm.xlu0 %245, %v227
    %v247 = vpop.permute.xlu0 %246
    %248 = vset.pattern.permute.xlu0 0
    %249 = vperm.xlu0 %248, %v228
    %v250 = vpop.permute.xlu0 %249
    %251 = vset.pattern.permute.xlu0 0
    %252 = vperm.xlu0 %251, %v229
    %v253 = vpop.permute.xlu0 %252
    %254 = vset.pattern.permute.xlu0 0
    %255 = vperm.xlu0 %254, %v230
    %v256 = vpop.permute.xlu0 %255
    %257 = vset.pattern.permute.xlu0 0
    %258 = vperm.xlu0 %257, %v231
    %v259 = vpop.permute.xlu0 %258
    %vm260 = vcmp.eq.s32.totalorder %v235, %v238
    %vm261 = vcmp.eq.s32.totalorder %v235, %v241
    %vm262 = vcmp.eq.s32.totalorder %v235, %v244
    %vm263 = vcmp.eq.s32.totalorder %v235, %v247
    %vm264 = vcmp.eq.s32.totalorder %v235, %v250
    %vm265 = vcmp.eq.s32.totalorder %v235, %v253
    %vm266 = vcmp.eq.s32.totalorder %v235, %v256
    %vm267 = vcmp.eq.s32.totalorder %v235, %v259
    %v268 = vsel %vm260, 1, 0
    %v269 = vsel %vm261, 1, 0
    %v270 = vsel %vm262, 1, 0
    %v271 = vsel %vm263, 1, 0
    %v272 = vsel %vm264, 1, 0
    %v273 = vsel %vm265, 1, 0
    %v274 = vsel %vm266, 1, 0
    %v275 = vsel %vm267, 1, 0
    %v276 = vcvt.s32.f32 %v268
    %v277 = vcvt.s32.f32 %v269
    %v278 = vcvt.s32.f32 %v270
    %v279 = vcvt.s32.f32 %v271
    %v280 = vcvt.s32.f32 %v272
    %v281 = vcvt.s32.f32 %v273
    %v282 = vcvt.s32.f32 %v274
    %v283 = vcvt.s32.f32 %v275
    %v284 = vlaneseq
    %v285 = vshrl.u32 %v284, 7
    %v286 = vadd.s32 %v285, 8
    %v287 = vadd.s32 %v285, 16
    %v288 = vadd.s32 %v285, 24
    %v289 = vlaneseq
    %v290 = vshrl.u32 %v289, 7
    %v291 = vsub.s32 0, %v290
    %v292 = vrot.slane %v232, %v291
    %vm293 = vcmp.eq.s32.totalorder %v285, %v292
    %vm294 = vcmp.eq.s32.totalorder %v286, %v292
    %vm295 = vcmp.eq.s32.totalorder %v287, %v292
    %vm296 = vcmp.eq.s32.totalorder %v288, %v292
    %v297 = vsel %vm293, 1, 0
    %v298 = vsel %vm294, 1, 0
    %v299 = vsel %vm295, 1, 0
    %v300 = vsel %vm296, 1, 0
    %v301 = vcvt.s32.f32 %v297
    %v302 = vcvt.s32.f32 %v298
    %v303 = vcvt.s32.f32 %v299
    %v304 = vcvt.s32.f32 %v300
    %v305 = vlaneseq
    %v306 = vshrl.u32 %v305, 7
    %v307 = vsub.s32 0, %v306
    %v308 = vrot.slane %v233, %v307
    %vm309 = vcmp.eq.s32.totalorder %v285, %v308
    %v310 = vsel %vm309, 1, 0
    %v311 = vcvt.s32.f32 %v310
    %v312 = vld [vmem:[%s1] sm:$0xff]
    %v313 = vld [vmem:[%s1 + $0x8] sm:$0xff]
    %v314 = vld [vmem:[%s1 + $0x10] sm:$0xff]
    %v315 = vld [vmem:[%s1 + $0x18] sm:$0xff]
    %v316 = vld [vmem:[%s1 + $0x20] sm:$0xff]
    %v317 = vld [vmem:[%s1 + $0x28] sm:$0xff]
    %v318 = vld [vmem:[%s1 + $0x30] sm:$0xff]
    %v319 = vld [vmem:[%s1 + $0x38] sm:$0xff]
    %v320 = vld [vmem:[%s4] sm:$0xff]
    %v321 = vld [vmem:[%s4 + $0x8] sm:$0xff]
    %v322 = vld [vmem:[%s4 + $0x10] sm:$0xff]
    %v324 = vlaneseq
    %v325 = vshrl.u32 %v324, 7
    %v326 = vsub.s32 0, %v325
    %v327 = vrot.slane %v95, %v326
    %v328 = vlaneseq
    %v329 = vshrl.u32 %v328, 7
    %v330 = vsub.s32 1, %v329
    %v331 = vrot.slane %v95, %v330
    %v332 = vlaneseq
    %v333 = vshrl.u32 %v332, 7
    %v334 = vsub.s32 2, %v333
    %v335 = vrot.slane %v95, %v334
    %vm339 = vcmask 64512
    %v341 = vsel %vm339, %v312, 0
    %v344 = vsel %vm339, %v313, 0
    %v347 = vsel %vm339, %v314, 0
    %v350 = vsel %vm339, %v315, 0
    %v353 = vsel %vm339, %v316, 0
    %v356 = vsel %vm339, %v317, 0
    %v359 = vsel %vm339, %v318, 0
    %v362 = vsel %vm339, %v319, 0
    %364 = vmatprep.subr.mxu0 %v321
    %365 = vmatpush1.msra.mxu0 %v320
    %366 = vmatprep.subr.mxu0 0.0
    %367 = vmatpush1.msra.mxu0 0.0
    %368 = vmatprep.subr.mxu0 0.0
    %369 = vmatpush1.msra.mxu0 0.0
    %370 = vmatprep.subr.mxu0 0.0
    %371 = vmatpush1.msra.mxu0 0.0
    %372 = vmatprep.subr.mxu0 0.0
    %373 = vmatpush1.msra.mxu0 0.0
    %374 = vmatprep.subr.mxu0 0.0
    %375 = vmatpush1.msra.mxu0 0.0
    %376 = vmatprep.subr.mxu0 0.0
    %377 = vmatpush1.msra.mxu0 0.0
    %378 = vmatprep.subr.mxu0 0.0
    %379 = vmatpush1.msra.mxu0 0.0
    %380 = vmatprep.subr.mxu0 0.0
    %381 = vmatpush1.msra.mxu0 0.0
    %382 = vmatprep.subr.mxu0 0.0
    %383 = vmatpush1.msra.mxu0 0.0
    %384 = vmatprep.subr.mxu0 0.0
    %385 = vmatpush1.msra.mxu0 0.0
    %386 = vmatprep.subr.mxu0 0.0
    %387 = vmatpush1.msra.mxu0 0.0
    %388 = vmatprep.subr.mxu0 0.0
    %389 = vmatpush1.msra.mxu0 0.0
    %390 = vmatprep.subr.mxu0 0.0
    %391 = vmatpush1.msra.mxu0 0.0
    %392 = vmatprep.subr.mxu0 0.0
    %393 = vmatpush1.msra.mxu0 0.0
    %394 = vmatprep.subr.mxu0 0.0
    %395 = vmatpush1.msra.mxu0 0.0
    %396 = vmatprep.subr.mxu0 0.0
    %397 = vmatpush1.msra.mxu0 0.0
    %398 = vmatprep.subr.mxu0 0.0
    %399 = vmatpush1.msra.mxu0 0.0
    %400 = vmatprep.subr.mxu0 0.0
    %401 = vmatpush1.msra.mxu0 0.0
    %402 = vmatprep.subr.mxu0 0.0
    %403 = vmatpush1.msra.mxu0 0.0
    %404 = vmatprep.subr.mxu0 0.0
    %405 = vmatpush1.msra.mxu0 0.0
    %406 = vmatprep.subr.mxu0 0.0
    %407 = vmatpush1.msra.mxu0 0.0
    %408 = vmatprep.subr.mxu0 0.0
    %409 = vmatpush1.msra.mxu0 0.0
    %410 = vmatprep.subr.mxu0 0.0
    %411 = vmatpush1.msra.mxu0 0.0
    %412 = vmatprep.subr.mxu0 0.0
    %413 = vmatpush1.msra.mxu0 0.0
    %414 = vmatprep.subr.mxu0 0.0
    %415 = vmatpush1.msra.mxu0 0.0
    %416 = vmatprep.subr.mxu0 0.0
    %417 = vmatpush1.msra.mxu0 0.0
    %418 = vmatprep.subr.mxu0 0.0
    %419 = vmatpush1.msra.mxu0 0.0
    %420 = vmatprep.subr.mxu0 0.0
    %421 = vmatpush1.msra.mxu0 0.0
    %422 = vmatprep.subr.mxu0 0.0
    %423 = vmatpush1.msra.mxu0 0.0
    %424 = vmatprep.subr.mxu0 0.0
    %425 = vmatpush1.msra.mxu0 0.0
    %426 = vmatprep.subr.mxu0 0.0
    %427 = vmatpush1.msra.mxu0 0.0
    %428 = vmatprep.mubr.f32.mxu0 0.0
    %429 = vmatmul.mubr.f32.gmra.mrb[0].mxu0 %v341
    %v430 = vpop.f32.mrb[0].mxu0
    %v431 = vadd.f32 %v327, %v430
    %v432 = vpop.f32.mrb[0].mxu0
    %v433 = vadd.f32 %v331, %v432
    %434 = vmatprep.mubr.f32.mxu0 0.0
    %435 = vmatmul.mubr.f32.gmra.mrb[0].mxu0 %v344
    %v436 = vpop.f32.mrb[0].mxu0
    %v437 = vadd.f32 %v327, %v436
    %v438 = vpop.f32.mrb[0].mxu0
    %v439 = vadd.f32 %v331, %v438
    %440 = vmatprep.mubr.f32.mxu0 0.0
    %441 = vmatmul.mubr.f32.gmra.mrb[0].mxu0 %v347
    %v442 = vpop.f32.mrb[0].mxu0
    %v443 = vadd.f32 %v327, %v442
    %v444 = vpop.f32.mrb[0].mxu0
    %v445 = vadd.f32 %v331, %v444
    %446 = vmatprep.mubr.f32.mxu0 0.0
    %447 = vmatmul.mubr.f32.gmra.mrb[0].mxu0 %v350
    %v448 = vpop.f32.mrb[0].mxu0
    %v449 = vadd.f32 %v327, %v448
    %v450 = vpop.f32.mrb[0].mxu0
    %v451 = vadd.f32 %v331, %v450
    %452 = vmatprep.mubr.f32.mxu0 0.0
    %453 = vmatmul.mubr.f32.gmra.mrb[0].mxu0 %v353
    %v454 = vpop.f32.mrb[0].mxu0
    %v455 = vadd.f32 %v327, %v454
    %v456 = vpop.f32.mrb[0].mxu0
    %v457 = vadd.f32 %v331, %v456
    %458 = vmatprep.mubr.f32.mxu0 0.0
    %459 = vmatmul.mubr.f32.gmra.mrb[0].mxu0 %v356
    %v460 = vpop.f32.mrb[0].mxu0
    %v461 = vadd.f32 %v327, %v460
    %v462 = vpop.f32.mrb[0].mxu0
    %v463 = vadd.f32 %v331, %v462
    %464 = vmatprep.mubr.f32.mxu0 0.0
    %465 = vmatmul.mubr.f32.gmra.mrb[0].mxu0 %v359
    %v466 = vpop.f32.mrb[0].mxu0
    %v467 = vadd.f32 %v327, %v466
    %v468 = vpop.f32.mrb[0].mxu0
    %v469 = vadd.f32 %v331, %v468
    %470 = vmatprep.mubr.f32.mxu0 0.0
    %471 = vmatmul.mubr.f32.gmra.mrb[0].mxu0 %v362
    %v472 = vpop.f32.mrb[0].mxu0
    %v473 = vadd.f32 %v327, %v472
    %v474 = vpop.f32.mrb[0].mxu0
    %v475 = vadd.f32 %v331, %v474
    %476 = vdwg.mxu0
    %477 = vmatprep.subr.mxu0 0.0
    %478 = vmatpush1.msra.mxu0 %v322
    %479 = vmatprep.subr.mxu0 0.0
    %480 = vmatpush1.msra.mxu0 0.0
    %481 = vmatprep.subr.mxu0 0.0
    %482 = vmatpush1.msra.mxu0 0.0
    %483 = vmatprep.subr.mxu0 0.0
    %484 = vmatpush1.msra.mxu0 0.0
    %485 = vmatprep.subr.mxu0 0.0
    %486 = vmatpush1.msra.mxu0 0.0
    %487 = vmatprep.subr.mxu0 0.0
    %488 = vmatpush1.msra.mxu0 0.0
    %489 = vmatprep.subr.mxu0 0.0
    %490 = vmatpush1.msra.mxu0 0.0
    %491 = vmatprep.subr.mxu0 0.0
    %492 = vmatpush1.msra.mxu0 0.0
    %493 = vmatprep.subr.mxu0 0.0
    %494 = vmatpush1.msra.mxu0 0.0
    %495 = vmatprep.subr.mxu0 0.0
    %496 = vmatpush1.msra.mxu0 0.0
    %497 = vmatprep.subr.mxu0 0.0
    %498 = vmatpush1.msra.mxu0 0.0
    %499 = vmatprep.subr.mxu0 0.0
    %500 = vmatpush1.msra.mxu0 0.0
    %501 = vmatprep.subr.mxu0 0.0
    %502 = vmatpush1.msra.mxu0 0.0
    %503 = vmatprep.subr.mxu0 0.0
    %504 = vmatpush1.msra.mxu0 0.0
    %505 = vmatprep.subr.mxu0 0.0
    %506 = vmatpush1.msra.mxu0 0.0
    %507 = vmatprep.subr.mxu0 0.0
    %508 = vmatpush1.msra.mxu0 0.0
    %509 = vmatprep.subr.mxu0 0.0
    %510 = vmatpush1.msra.mxu0 0.0
    %511 = vmatprep.subr.mxu0 0.0
    %512 = vmatpush1.msra.mxu0 0.0
    %513 = vmatprep.subr.mxu0 0.0
    %514 = vmatpush1.msra.mxu0 0.0
    %515 = vmatprep.subr.mxu0 0.0
    %516 = vmatpush1.msra.mxu0 0.0
    %517 = vmatprep.subr.mxu0 0.0
    %518 = vmatpush1.msra.mxu0 0.0
    %519 = vmatprep.subr.mxu0 0.0
    %520 = vmatpush1.msra.mxu0 0.0
    %521 = vmatprep.subr.mxu0 0.0
    %522 = vmatpush1.msra.mxu0 0.0
    %523 = vmatprep.subr.mxu0 0.0
    %524 = vmatpush1.msra.mxu0 0.0
    %525 = vmatprep.subr.mxu0 0.0
    %526 = vmatpush1.msra.mxu0 0.0
    %527 = vmatprep.subr.mxu0 0.0
    %528 = vmatpush1.msra.mxu0 0.0
    %529 = vmatprep.subr.mxu0 0.0
    %530 = vmatpush1.msra.mxu0 0.0
    %531 = vmatprep.subr.mxu0 0.0
    %532 = vmatpush1.msra.mxu0 0.0
    %533 = vmatprep.subr.mxu0 0.0
    %534 = vmatpush1.msra.mxu0 0.0
    %535 = vmatprep.subr.mxu0 0.0
    %536 = vmatpush1.msra.mxu0 0.0
    %537 = vmatprep.subr.mxu0 0.0
    %538 = vmatpush1.msra.mxu0 0.0
    %539 = vmatprep.subr.mxu0 0.0
    %540 = vmatpush1.msra.mxu0 0.0
    %541 = vmatprep.mubr.f32.mxu0 0.0
    %542 = vmatmul.mubr.f32.gmra.mrb[0].mxu0 %v341
    %v543 = vpop.f32.mrb[0].mxu0
    %v544 = vadd.f32 %v335, %v543
    %v545 = vpop.f32.mrb[0].mxu0
    %546 = vmatprep.mubr.f32.mxu0 0.0
    %547 = vmatmul.mubr.f32.gmra.mrb[0].mxu0 %v344
    %v548 = vpop.f32.mrb[0].mxu0
    %v549 = vadd.f32 %v335, %v548
    %v550 = vpop.f32.mrb[0].mxu0
    %551 = vmatprep.mubr.f32.mxu0 0.0
    %552 = vmatmul.mubr.f32.gmra.mrb[0].mxu0 %v347
    %v553 = vpop.f32.mrb[0].mxu0
    %v554 = vadd.f32 %v335, %v553
    %v555 = vpop.f32.mrb[0].mxu0
    %556 = vmatprep.mubr.f32.mxu0 0.0
    %557 = vmatmul.mubr.f32.gmra.mrb[0].mxu0 %v350
    %v558 = vpop.f32.mrb[0].mxu0
    %v559 = vadd.f32 %v335, %v558
    %v560 = vpop.f32.mrb[0].mxu0
    %561 = vmatprep.mubr.f32.mxu0 0.0
    %562 = vmatmul.mubr.f32.gmra.mrb[0].mxu0 %v353
    %v563 = vpop.f32.mrb[0].mxu0
    %v564 = vadd.f32 %v335, %v563
    %v565 = vpop.f32.mrb[0].mxu0
    %566 = vmatprep.mubr.f32.mxu0 0.0
    %567 = vmatmul.mubr.f32.gmra.mrb[0].mxu0 %v356
    %v568 = vpop.f32.mrb[0].mxu0
    %v569 = vadd.f32 %v335, %v568
    %v570 = vpop.f32.mrb[0].mxu0
    %571 = vmatprep.mubr.f32.mxu0 0.0
    %572 = vmatmul.mubr.f32.gmra.mrb[0].mxu0 %v359
    %v573 = vpop.f32.mrb[0].mxu0
    %v574 = vadd.f32 %v335, %v573
    %v575 = vpop.f32.mrb[0].mxu0
    %576 = vmatprep.mubr.f32.mxu0 0.0
    %577 = vmatmul.mubr.f32.gmra.mrb[0].mxu0 %v362
    %v578 = vpop.f32.mrb[0].mxu0
    %v579 = vadd.f32 %v335, %v578
    %v580 = vpop.f32.mrb[0].mxu0
    %581 = vdwg.mxu0
    %vm582 = vcmask 261120
    %v584 = vsel %vm582, %v276, 0
    %v587 = vsel %vm582, %v277, 0
    %v590 = vsel %vm582, %v278, 0
    %v593 = vsel %vm582, %v279, 0
    %v596 = vsel %vm582, %v280, 0
    %v599 = vsel %vm582, %v281, 0
    %v602 = vsel %vm582, %v282, 0
    %v605 = vsel %vm582, %v283, 0
    %607 = vmatprep.subr.mxu0 0.0
    %608 = vmatpush1.msra.mxu0 %v220
    %609 = vmatprep.subr.mxu0 0.0
    %610 = vmatpush1.msra.mxu0 %v221
    %611 = vmatprep.subr.mxu0 0.0
    %612 = vmatpush1.msra.mxu0 %v222
    %613 = vmatprep.subr.mxu0 0.0
    %614 = vmatpush1.msra.mxu0 %v223
    %615 = vmatprep.subr.mxu0 0.0
    %616 = vmatpush1.msra.mxu0 0.0
    %617 = vmatprep.subr.mxu0 0.0
    %618 = vmatpush1.msra.mxu0 0.0
    %619 = vmatprep.subr.mxu0 0.0
    %620 = vmatpush1.msra.mxu0 0.0
    %621 = vmatprep.subr.mxu0 0.0
    %622 = vmatpush1.msra.mxu0 0.0
    %623 = vmatprep.subr.mxu0 0.0
    %624 = vmatpush1.msra.mxu0 0.0
    %625 = vmatprep.subr.mxu0 0.0
    %626 = vmatpush1.msra.mxu0 0.0
    %627 = vmatprep.subr.mxu0 0.0
    %628 = vmatpush1.msra.mxu0 0.0
    %629 = vmatprep.subr.mxu0 0.0
    %630 = vmatpush1.msra.mxu0 0.0
    %631 = vmatprep.subr.mxu0 0.0
    %632 = vmatpush1.msra.mxu0 0.0
    %633 = vmatprep.subr.mxu0 0.0
    %634 = vmatpush1.msra.mxu0 0.0
    %635 = vmatprep.subr.mxu0 0.0
    %636 = vmatpush1.msra.mxu0 0.0
    %637 = vmatprep.subr.mxu0 0.0
    %638 = vmatpush1.msra.mxu0 0.0
    %639 = vmatprep.subr.mxu0 0.0
    %640 = vmatpush1.msra.mxu0 0.0
    %641 = vmatprep.subr.mxu0 0.0
    %642 = vmatpush1.msra.mxu0 0.0
    %643 = vmatprep.subr.mxu0 0.0
    %644 = vmatpush1.msra.mxu0 0.0
    %645 = vmatprep.subr.mxu0 0.0
    %646 = vmatpush1.msra.mxu0 0.0
    %647 = vmatprep.subr.mxu0 0.0
    %648 = vmatpush1.msra.mxu0 0.0
    %649 = vmatprep.subr.mxu0 0.0
    %650 = vmatpush1.msra.mxu0 0.0
    %651 = vmatprep.subr.mxu0 0.0
    %652 = vmatpush1.msra.mxu0 0.0
    %653 = vmatprep.subr.mxu0 0.0
    %654 = vmatpush1.msra.mxu0 0.0
    %655 = vmatprep.subr.mxu0 0.0
    %656 = vmatpush1.msra.mxu0 0.0
    %657 = vmatprep.subr.mxu0 0.0
    %658 = vmatpush1.msra.mxu0 0.0
    %659 = vmatprep.subr.mxu0 0.0
    %660 = vmatpush1.msra.mxu0 0.0
    %661 = vmatprep.subr.mxu0 0.0
    %662 = vmatpush1.msra.mxu0 0.0
    %663 = vmatprep.subr.mxu0 0.0
    %664 = vmatpush1.msra.mxu0 0.0
    %665 = vmatprep.subr.mxu0 0.0
    %666 = vmatpush1.msra.mxu0 0.0
    %667 = vmatprep.subr.mxu0 0.0
    %668 = vmatpush1.msra.mxu0 0.0
    %669 = vmatprep.subr.mxu0 0.0
    %670 = vmatpush1.msra.mxu0 0.0
    %671 = vmatprep.mubr.f32.mxu0 0.0
    %672 = vmatmul.mubr.f32.gmra.mrb[0].mxu0 %v584
    %v673 = vpop.f32.mrb[0].mxu0
    %v674 = vadd.f32 %v431, %v673
    %v675 = vpop.f32.mrb[0].mxu0
    %676 = vmatprep.mubr.f32.mxu0 0.0
    %677 = vmatmul.mubr.f32.gmra.mrb[0].mxu0 %v587
    %v678 = vpop.f32.mrb[0].mxu0
    %v679 = vadd.f32 %v437, %v678
    %v680 = vpop.f32.mrb[0].mxu0
    %681 = vmatprep.mubr.f32.mxu0 0.0
    %682 = vmatmul.mubr.f32.gmra.mrb[0].mxu0 %v590
    %v683 = vpop.f32.mrb[0].mxu0
    %v684 = vadd.f32 %v443, %v683
    %v685 = vpop.f32.mrb[0].mxu0
    %686 = vmatprep.mubr.f32.mxu0 0.0
    %687 = vmatmul.mubr.f32.gmra.mrb[0].mxu0 %v593
    %v688 = vpop.f32.mrb[0].mxu0
    %v689 = vadd.f32 %v449, %v688
    %v690 = vpop.f32.mrb[0].mxu0
    %691 = vmatprep.mubr.f32.mxu0 0.0
    %692 = vmatmul.mubr.f32.gmra.mrb[0].mxu0 %v596
    %v693 = vpop.f32.mrb[0].mxu0
    %v694 = vadd.f32 %v455, %v693
    %v695 = vpop.f32.mrb[0].mxu0
    %696 = vmatprep.mubr.f32.mxu0 0.0
    %697 = vmatmul.mubr.f32.gmra.mrb[0].mxu0 %v599
    %v698 = vpop.f32.mrb[0].mxu0
    %v699 = vadd.f32 %v461, %v698
    %v700 = vpop.f32.mrb[0].mxu0
    %701 = vmatprep.mubr.f32.mxu0 0.0
    %702 = vmatmul.mubr.f32.gmra.mrb[0].mxu0 %v602
    %v703 = vpop.f32.mrb[0].mxu0
    %v704 = vadd.f32 %v467, %v703
    %v705 = vpop.f32.mrb[0].mxu0
    %706 = vmatprep.mubr.f32.mxu0 0.0
    %707 = vmatmul.mubr.f32.gmra.mrb[0].mxu0 %v605
    %v708 = vpop.f32.mrb[0].mxu0
    %v709 = vadd.f32 %v473, %v708
    %v710 = vpop.f32.mrb[0].mxu0
    %711 = vdwg.mxu0
    %v712 = vmax.f32 %v674, 0.0
    %v713 = vmax.f32 %v679, 0.0
    %v714 = vmax.f32 %v684, 0.0
    %v715 = vmax.f32 %v689, 0.0
    %v716 = vmax.f32 %v694, 0.0
    %v717 = vmax.f32 %v699, 0.0
    %v718 = vmax.f32 %v704, 0.0
    %v719 = vmax.f32 %v709, 0.0
    %vm720 = vcmask 523264
    %v722 = vsel %vm720, %v301, 0
    %v725 = vsel %vm720, %v302, 0
    %v728 = vsel %vm720, %v303, 0
    %v731 = vsel %vm720, %v304, 0
    %733 = vmatprep.subr.mxu0 0.0
    %734 = vmatpush1.msra.mxu0 %v712
    %735 = vmatprep.subr.mxu0 0.0
    %736 = vmatpush1.msra.mxu0 %v713
    %737 = vmatprep.subr.mxu0 0.0
    %738 = vmatpush1.msra.mxu0 %v714
    %739 = vmatprep.subr.mxu0 0.0
    %740 = vmatpush1.msra.mxu0 %v715
    %741 = vmatprep.subr.mxu0 0.0
    %742 = vmatpush1.msra.mxu0 %v716
    %743 = vmatprep.subr.mxu0 0.0
    %744 = vmatpush1.msra.mxu0 %v717
    %745 = vmatprep.subr.mxu0 0.0
    %746 = vmatpush1.msra.mxu0 %v718
    %747 = vmatprep.subr.mxu0 0.0
    %748 = vmatpush1.msra.mxu0 %v719
    %749 = vmatprep.subr.mxu0 0.0
    %750 = vmatpush1.msra.mxu0 0.0
    %751 = vmatprep.subr.mxu0 0.0
    %752 = vmatpush1.msra.mxu0 0.0
    %753 = vmatprep.subr.mxu0 0.0
    %754 = vmatpush1.msra.mxu0 0.0
    %755 = vmatprep.subr.mxu0 0.0
    %756 = vmatpush1.msra.mxu0 0.0
    %757 = vmatprep.subr.mxu0 0.0
    %758 = vmatpush1.msra.mxu0 0.0
    %759 = vmatprep.subr.mxu0 0.0
    %760 = vmatpush1.msra.mxu0 0.0
    %761 = vmatprep.subr.mxu0 0.0
    %762 = vmatpush1.msra.mxu0 0.0
    %763 = vmatprep.subr.mxu0 0.0
    %764 = vmatpush1.msra.mxu0 0.0
    %765 = vmatprep.subr.mxu0 0.0
    %766 = vmatpush1.msra.mxu0 0.0
    %767 = vmatprep.subr.mxu0 0.0
    %768 = vmatpush1.msra.mxu0 0.0
    %769 = vmatprep.subr.mxu0 0.0
    %770 = vmatpush1.msra.mxu0 0.0
    %771 = vmatprep.subr.mxu0 0.0
    %772 = vmatpush1.msra.mxu0 0.0
    %773 = vmatprep.subr.mxu0 0.0
    %774 = vmatpush1.msra.mxu0 0.0
    %775 = vmatprep.subr.mxu0 0.0
    %776 = vmatpush1.msra.mxu0 0.0
    %777 = vmatprep.subr.mxu0 0.0
    %778 = vmatpush1.msra.mxu0 0.0
    %779 = vmatprep.subr.mxu0 0.0
    %780 = vmatpush1.msra.mxu0 0.0
    %781 = vmatprep.subr.mxu0 0.0
    %782 = vmatpush1.msra.mxu0 0.0
    %783 = vmatprep.subr.mxu0 0.0
    %784 = vmatpush1.msra.mxu0 0.0
    %785 = vmatprep.subr.mxu0 0.0
    %786 = vmatpush1.msra.mxu0 0.0
    %787 = vmatprep.subr.mxu0 0.0
    %788 = vmatpush1.msra.mxu0 0.0
    %789 = vmatprep.subr.mxu0 0.0
    %790 = vmatpush1.msra.mxu0 0.0
    %791 = vmatprep.subr.mxu0 0.0
    %792 = vmatpush1.msra.mxu0 0.0
    %793 = vmatprep.subr.mxu0 0.0
    %794 = vmatpush1.msra.mxu0 0.0
    %795 = vmatprep.subr.mxu0 0.0
    %796 = vmatpush1.msra.mxu0 0.0
    %797 = vmatprep.mubr.f32.mxu0 0.0
    %798 = vmatmul.mubr.f32.gmra.mrb[0].mxu0 %v722
    %v799 = vpop.f32.mrb[0].mxu0
    %v800 = vadd.f32 0.0, %v799
    %v801 = vpop.f32.mrb[0].mxu0
    %802 = vmatprep.mubr.f32.mxu0 0.0
    %803 = vmatmul.mubr.f32.gmra.mrb[0].mxu0 %v725
    %v804 = vpop.f32.mrb[0].mxu0
    %v805 = vadd.f32 0.0, %v804
    %v806 = vpop.f32.mrb[0].mxu0
    %807 = vmatprep.mubr.f32.mxu0 0.0
    %808 = vmatmul.mubr.f32.gmra.mrb[0].mxu0 %v728
    %v809 = vpop.f32.mrb[0].mxu0
    %v810 = vadd.f32 0.0, %v809
    %v811 = vpop.f32.mrb[0].mxu0
    %812 = vmatprep.mubr.f32.mxu0 0.0
    %813 = vmatmul.mubr.f32.gmra.mrb[0].mxu0 %v731
    %v814 = vpop.f32.mrb[0].mxu0
    %v815 = vadd.f32 0.0, %v814
    %v816 = vpop.f32.mrb[0].mxu0
    %817 = vdwg.mxu0
    %v818 = vadd.f32 %v220, %v800
    %v819 = vadd.f32 %v221, %v805
    %v820 = vadd.f32 %v222, %v810
    %v821 = vadd.f32 %v223, %v815
    %822 = vmatprep.subr.mxu0 0.0
    %823 = vmatpush1.msra.mxu0 %v45
    %824 = vmatprep.subr.mxu0 0.0
    %825 = vmatpush1.msra.mxu0 %v46
    %826 = vmatprep.subr.mxu0 0.0
    %827 = vmatpush1.msra.mxu0 %v47
    %828 = vmatprep.subr.mxu0 0.0
    %829 = vmatpush1.msra.mxu0 %v48
    %830 = vmatprep.subr.mxu0 0.0
    %831 = vmatpush1.msra.mxu0 %v49
    %832 = vmatprep.subr.mxu0 0.0
    %833 = vmatpush1.msra.mxu0 %v50
    %834 = vmatprep.subr.mxu0 0.0
    %835 = vmatpush1.msra.mxu0 %v51
    %836 = vmatprep.subr.mxu0 0.0
    %837 = vmatpush1.msra.mxu0 %v52
    %838 = vmatprep.subr.mxu0 0.0
    %839 = vmatpush1.msra.mxu0 %v53
    %840 = vmatprep.subr.mxu0 0.0
    %841 = vmatpush1.msra.mxu0 %v54
    %842 = vmatprep.subr.mxu0 0.0
    %843 = vmatpush1.msra.mxu0 %v55
    %844 = vmatprep.subr.mxu0 0.0
    %845 = vmatpush1.msra.mxu0 %v56
    %846 = vmatprep.subr.mxu0 0.0
    %847 = vmatpush1.msra.mxu0 %v57
    %848 = vmatprep.subr.mxu0 0.0
    %849 = vmatpush1.msra.mxu0 %v58
    %850 = vmatprep.subr.mxu0 0.0
    %851 = vmatpush1.msra.mxu0 %v59
    %852 = vmatprep.subr.mxu0 0.0
    %853 = vmatpush1.msra.mxu0 %v60
    %854 = vmatprep.subr.mxu0 0.0
    %855 = vmatpush1.msra.mxu0 0.0
    %856 = vmatprep.subr.mxu0 0.0
    %857 = vmatpush1.msra.mxu0 0.0
    %858 = vmatprep.subr.mxu0 0.0
    %859 = vmatpush1.msra.mxu0 0.0
    %860 = vmatprep.subr.mxu0 0.0
    %861 = vmatpush1.msra.mxu0 0.0
    %862 = vmatprep.subr.mxu0 0.0
    %863 = vmatpush1.msra.mxu0 0.0
    %864 = vmatprep.subr.mxu0 0.0
    %865 = vmatpush1.msra.mxu0 0.0
    %866 = vmatprep.subr.mxu0 0.0
    %867 = vmatpush1.msra.mxu0 0.0
    %868 = vmatprep.subr.mxu0 0.0
    %869 = vmatpush1.msra.mxu0 0.0
    %870 = vmatprep.subr.mxu0 0.0
    %871 = vmatpush1.msra.mxu0 0.0
    %872 = vmatprep.subr.mxu0 0.0
    %873 = vmatpush1.msra.mxu0 0.0
    %874 = vmatprep.subr.mxu0 0.0
    %875 = vmatpush1.msra.mxu0 0.0
    %876 = vmatprep.subr.mxu0 0.0
    %877 = vmatpush1.msra.mxu0 0.0
    %878 = vmatprep.subr.mxu0 0.0
    %879 = vmatpush1.msra.mxu0 0.0
    %880 = vmatprep.subr.mxu0 0.0
    %881 = vmatpush1.msra.mxu0 0.0
    %882 = vmatprep.subr.mxu0 0.0
    %883 = vmatpush1.msra.mxu0 0.0
    %884 = vmatprep.subr.mxu0 0.0
    %885 = vmatpush1.msra.mxu0 0.0
    %886 = vmatprep.mubr.f32.mxu0 0.0
    %887 = vmatmul.mubr.f32.gmra.mrb[0].mxu0 %v818
    %v888 = vpop.f32.mrb[0].mxu0
    %v889 = vadd.f32 %v104, %v888
    %v890 = vpop.f32.mrb[0].mxu0
    %891 = vmatprep.mubr.f32.mxu0 0.0
    %892 = vmatmul.mubr.f32.gmra.mrb[0].mxu0 %v819
    %v893 = vpop.f32.mrb[0].mxu0
    %v894 = vadd.f32 %v104, %v893
    %v895 = vpop.f32.mrb[0].mxu0
    %896 = vmatprep.mubr.f32.mxu0 0.0
    %897 = vmatmul.mubr.f32.gmra.mrb[0].mxu0 %v820
    %v898 = vpop.f32.mrb[0].mxu0
    %v899 = vadd.f32 %v104, %v898
    %v900 = vpop.f32.mrb[0].mxu0
    %901 = vmatprep.mubr.f32.mxu0 0.0
    %902 = vmatmul.mubr.f32.gmra.mrb[0].mxu0 %v821
    %v903 = vpop.f32.mrb[0].mxu0
    %v904 = vadd.f32 %v104, %v903
    %v905 = vpop.f32.mrb[0].mxu0
    %906 = vdwg.mxu0
    %v907 = vmax.f32 %v889, 0.0
    %v908 = vmax.f32 %v894, 0.0
    %v909 = vmax.f32 %v899, 0.0
    %v910 = vmax.f32 %v904, 0.0
    %911 = vmatprep.subr.mxu0 0.0
    %912 = vmatpush1.msra.mxu0 %v61
    %913 = vmatprep.subr.mxu0 0.0
    %914 = vmatpush1.msra.mxu0 %v62
    %915 = vmatprep.subr.mxu0 0.0
    %916 = vmatpush1.msra.mxu0 %v63
    %917 = vmatprep.subr.mxu0 0.0
    %918 = vmatpush1.msra.mxu0 %v64
    %919 = vmatprep.subr.mxu0 0.0
    %920 = vmatpush1.msra.mxu0 %v65
    %921 = vmatprep.subr.mxu0 0.0
    %922 = vmatpush1.msra.mxu0 %v66
    %923 = vmatprep.subr.mxu0 0.0
    %924 = vmatpush1.msra.mxu0 %v67
    %925 = vmatprep.subr.mxu0 0.0
    %926 = vmatpush1.msra.mxu0 %v68
    %927 = vmatprep.subr.mxu0 0.0
    %928 = vmatpush1.msra.mxu0 %v69
    %929 = vmatprep.subr.mxu0 0.0
    %930 = vmatpush1.msra.mxu0 %v70
    %931 = vmatprep.subr.mxu0 0.0
    %932 = vmatpush1.msra.mxu0 %v71
    %933 = vmatprep.subr.mxu0 0.0
    %934 = vmatpush1.msra.mxu0 %v72
    %935 = vmatprep.subr.mxu0 0.0
    %936 = vmatpush1.msra.mxu0 %v73
    %937 = vmatprep.subr.mxu0 0.0
    %938 = vmatpush1.msra.mxu0 %v74
    %939 = vmatprep.subr.mxu0 0.0
    %940 = vmatpush1.msra.mxu0 %v75
    %941 = vmatprep.subr.mxu0 0.0
    %942 = vmatpush1.msra.mxu0 %v76
    %943 = vmatprep.subr.mxu0 0.0
    %944 = vmatpush1.msra.mxu0 0.0
    %945 = vmatprep.subr.mxu0 0.0
    %946 = vmatpush1.msra.mxu0 0.0
    %947 = vmatprep.subr.mxu0 0.0
    %948 = vmatpush1.msra.mxu0 0.0
    %949 = vmatprep.subr.mxu0 0.0
    %950 = vmatpush1.msra.mxu0 0.0
    %951 = vmatprep.subr.mxu0 0.0
    %952 = vmatpush1.msra.mxu0 0.0
    %953 = vmatprep.subr.mxu0 0.0
    %954 = vmatpush1.msra.mxu0 0.0
    %955 = vmatprep.subr.mxu0 0.0
    %956 = vmatpush1.msra.mxu0 0.0
    %957 = vmatprep.subr.mxu0 0.0
    %958 = vmatpush1.msra.mxu0 0.0
    %959 = vmatprep.subr.mxu0 0.0
    %960 = vmatpush1.msra.mxu0 0.0
    %961 = vmatprep.subr.mxu0 0.0
    %962 = vmatpush1.msra.mxu0 0.0
    %963 = vmatprep.subr.mxu0 0.0
    %964 = vmatpush1.msra.mxu0 0.0
    %965 = vmatprep.subr.mxu0 0.0
    %966 = vmatpush1.msra.mxu0 0.0
    %967 = vmatprep.subr.mxu0 0.0
    %968 = vmatpush1.msra.mxu0 0.0
    %969 = vmatprep.subr.mxu0 0.0
    %970 = vmatpush1.msra.mxu0 0.0
    %971 = vmatprep.subr.mxu0 0.0
    %972 = vmatpush1.msra.mxu0 0.0
    %973 = vmatprep.subr.mxu0 0.0
    %974 = vmatpush1.msra.mxu0 0.0
    %975 = vmatprep.mubr.f32.mxu0 0.0
    %976 = vmatmul.mubr.f32.gmra.mrb[0].mxu0 %v907
    %v977 = vpop.f32.mrb[0].mxu0
    %v978 = vadd.f32 %v110, %v977
    %v979 = vpop.f32.mrb[0].mxu0
    %980 = vmatprep.mubr.f32.mxu0 0.0
    %981 = vmatmul.mubr.f32.gmra.mrb[0].mxu0 %v908
    %v982 = vpop.f32.mrb[0].mxu0
    %v983 = vadd.f32 %v110, %v982
    %v984 = vpop.f32.mrb[0].mxu0
    %985 = vmatprep.mubr.f32.mxu0 0.0
    %986 = vmatmul.mubr.f32.gmra.mrb[0].mxu0 %v909
    %v987 = vpop.f32.mrb[0].mxu0
    %v988 = vadd.f32 %v110, %v987
    %v989 = vpop.f32.mrb[0].mxu0
    %990 = vmatprep.mubr.f32.mxu0 0.0
    %991 = vmatmul.mubr.f32.gmra.mrb[0].mxu0 %v910
    %v992 = vpop.f32.mrb[0].mxu0
    %v993 = vadd.f32 %v110, %v992
    %v994 = vpop.f32.mrb[0].mxu0
    %995 = vdwg.mxu0
    %v996 = vmax.f32 %v978, 0.0
    %v997 = vmax.f32 %v983, 0.0
    %v998 = vmax.f32 %v988, 0.0
    %v999 = vmax.f32 %v993, 0.0
    %1000 = vmatprep.subr.mxu0 0.0
    %1001 = vmatpush1.msra.mxu0 %v996
    %1002 = vmatprep.subr.mxu0 0.0
    %1003 = vmatpush1.msra.mxu0 %v997
    %1004 = vmatprep.subr.mxu0 0.0
    %1005 = vmatpush1.msra.mxu0 %v998
    %1006 = vmatprep.subr.mxu0 0.0
    %1007 = vmatpush1.msra.mxu0 %v999
    %1008 = vmatprep.subr.mxu0 0.0
    %1009 = vmatpush1.msra.mxu0 0.0
    %1010 = vmatprep.subr.mxu0 0.0
    %1011 = vmatpush1.msra.mxu0 0.0
    %1012 = vmatprep.subr.mxu0 0.0
    %1013 = vmatpush1.msra.mxu0 0.0
    %1014 = vmatprep.subr.mxu0 0.0
    %1015 = vmatpush1.msra.mxu0 0.0
    %1016 = vmatprep.subr.mxu0 0.0
    %1017 = vmatpush1.msra.mxu0 0.0
    %1018 = vmatprep.subr.mxu0 0.0
    %1019 = vmatpush1.msra.mxu0 0.0
    %1020 = vmatprep.subr.mxu0 0.0
    %1021 = vmatpush1.msra.mxu0 0.0
    %1022 = vmatprep.subr.mxu0 0.0
    %1023 = vmatpush1.msra.mxu0 0.0
    %1024 = vmatprep.subr.mxu0 0.0
    %1025 = vmatpush1.msra.mxu0 0.0
    %1026 = vmatprep.subr.mxu0 0.0
    %1027 = vmatpush1.msra.mxu0 0.0
    %1028 = vmatprep.subr.mxu0 0.0
    %1029 = vmatpush1.msra.mxu0 0.0
    %1030 = vmatprep.subr.mxu0 0.0
    %1031 = vmatpush1.msra.mxu0 0.0
    %1032 = vmatprep.subr.mxu0 0.0
    %1033 = vmatpush1.msra.mxu0 0.0
    %1034 = vmatprep.subr.mxu0 0.0
    %1035 = vmatpush1.msra.mxu0 0.0
    %1036 = vmatprep.subr.mxu0 0.0
    %1037 = vmatpush1.msra.mxu0 0.0
    %1038 = vmatprep.subr.mxu0 0.0
    %1039 = vmatpush1.msra.mxu0 0.0
    %1040 = vmatprep.subr.mxu0 0.0
    %1041 = vmatpush1.msra.mxu0 0.0
    %1042 = vmatprep.subr.mxu0 0.0
    %1043 = vmatpush1.msra.mxu0 0.0
    %1044 = vmatprep.subr.mxu0 0.0
    %1045 = vmatpush1.msra.mxu0 0.0
    %1046 = vmatprep.subr.mxu0 0.0
    %1047 = vmatpush1.msra.mxu0 0.0
    %1048 = vmatprep.subr.mxu0 0.0
    %1049 = vmatpush1.msra.mxu0 0.0
    %1050 = vmatprep.subr.mxu0 0.0
    %1051 = vmatpush1.msra.mxu0 0.0
    %1052 = vmatprep.subr.mxu0 0.0
    %1053 = vmatpush1.msra.mxu0 0.0
    %1054 = vmatprep.subr.mxu0 0.0
    %1055 = vmatpush1.msra.mxu0 0.0
    %1056 = vmatprep.subr.mxu0 0.0
    %1057 = vmatpush1.msra.mxu0 0.0
    %1058 = vmatprep.subr.mxu0 0.0
    %1059 = vmatpush1.msra.mxu0 0.0
    %1060 = vmatprep.subr.mxu0 0.0
    %1061 = vmatpush1.msra.mxu0 0.0
    %1062 = vmatprep.subr.mxu0 0.0
    %1063 = vmatpush1.msra.mxu0 0.0
    %1064 = vmatprep.mubr.f32.mxu0 0.0
    %1065 = vmatmul.mubr.f32.gmra.mrb[0].mxu0 %v584
    %v1066 = vpop.f32.mrb[0].mxu0
    %v1067 = vadd.f32 %v433, %v1066
    %v1068 = vpop.f32.mrb[0].mxu0
    %1069 = vmatprep.mubr.f32.mxu0 0.0
    %1070 = vmatmul.mubr.f32.gmra.mrb[0].mxu0 %v587
    %v1071 = vpop.f32.mrb[0].mxu0
    %v1072 = vadd.f32 %v439, %v1071
    %v1073 = vpop.f32.mrb[0].mxu0
    %1074 = vmatprep.mubr.f32.mxu0 0.0
    %1075 = vmatmul.mubr.f32.gmra.mrb[0].mxu0 %v590
    %v1076 = vpop.f32.mrb[0].mxu0
    %v1077 = vadd.f32 %v445, %v1076
    %v1078 = vpop.f32.mrb[0].mxu0
    %1079 = vmatprep.mubr.f32.mxu0 0.0
    %1080 = vmatmul.mubr.f32.gmra.mrb[0].mxu0 %v593
    %v1081 = vpop.f32.mrb[0].mxu0
    %v1082 = vadd.f32 %v451, %v1081
    %v1083 = vpop.f32.mrb[0].mxu0
    %1084 = vmatprep.mubr.f32.mxu0 0.0
    %1085 = vmatmul.mubr.f32.gmra.mrb[0].mxu0 %v596
    %v1086 = vpop.f32.mrb[0].mxu0
    %v1087 = vadd.f32 %v457, %v1086
    %v1088 = vpop.f32.mrb[0].mxu0
    %1089 = vmatprep.mubr.f32.mxu0 0.0
    %1090 = vmatmul.mubr.f32.gmra.mrb[0].mxu0 %v599
    %v1091 = vpop.f32.mrb[0].mxu0
    %v1092 = vadd.f32 %v463, %v1091
    %v1093 = vpop.f32.mrb[0].mxu0
    %1094 = vmatprep.mubr.f32.mxu0 0.0
    %1095 = vmatmul.mubr.f32.gmra.mrb[0].mxu0 %v602
    %v1096 = vpop.f32.mrb[0].mxu0
    %v1097 = vadd.f32 %v469, %v1096
    %v1098 = vpop.f32.mrb[0].mxu0
    %1099 = vmatprep.mubr.f32.mxu0 0.0
    %1100 = vmatmul.mubr.f32.gmra.mrb[0].mxu0 %v605
    %v1101 = vpop.f32.mrb[0].mxu0
    %v1102 = vadd.f32 %v475, %v1101
    %v1103 = vpop.f32.mrb[0].mxu0
    %1104 = vdwg.mxu0
    %v1105 = vmax.f32 %v1067, 0.0
    %v1106 = vmax.f32 %v1072, 0.0
    %v1107 = vmax.f32 %v1077, 0.0
    %v1108 = vmax.f32 %v1082, 0.0
    %v1109 = vmax.f32 %v1087, 0.0
    %v1110 = vmax.f32 %v1092, 0.0
    %v1111 = vmax.f32 %v1097, 0.0
    %v1112 = vmax.f32 %v1102, 0.0
    %1113 = vmatprep.subr.mxu0 0.0
    %1114 = vmatpush1.msra.mxu0 %v1105
    %1115 = vmatprep.subr.mxu0 0.0
    %1116 = vmatpush1.msra.mxu0 %v1106
    %1117 = vmatprep.subr.mxu0 0.0
    %1118 = vmatpush1.msra.mxu0 %v1107
    %1119 = vmatprep.subr.mxu0 0.0
    %1120 = vmatpush1.msra.mxu0 %v1108
    %1121 = vmatprep.subr.mxu0 0.0
    %1122 = vmatpush1.msra.mxu0 %v1109
    %1123 = vmatprep.subr.mxu0 0.0
    %1124 = vmatpush1.msra.mxu0 %v1110
    %1125 = vmatprep.subr.mxu0 0.0
    %1126 = vmatpush1.msra.mxu0 %v1111
    %1127 = vmatprep.subr.mxu0 0.0
    %1128 = vmatpush1.msra.mxu0 %v1112
    %1129 = vmatprep.subr.mxu0 0.0
    %1130 = vmatpush1.msra.mxu0 0.0
    %1131 = vmatprep.subr.mxu0 0.0
    %1132 = vmatpush1.msra.mxu0 0.0
    %1133 = vmatprep.subr.mxu0 0.0
    %1134 = vmatpush1.msra.mxu0 0.0
    %1135 = vmatprep.subr.mxu0 0.0
    %1136 = vmatpush1.msra.mxu0 0.0
    %1137 = vmatprep.subr.mxu0 0.0
    %1138 = vmatpush1.msra.mxu0 0.0
    %1139 = vmatprep.subr.mxu0 0.0
    %1140 = vmatpush1.msra.mxu0 0.0
    %1141 = vmatprep.subr.mxu0 0.0
    %1142 = vmatpush1.msra.mxu0 0.0
    %1143 = vmatprep.subr.mxu0 0.0
    %1144 = vmatpush1.msra.mxu0 0.0
    %1145 = vmatprep.subr.mxu0 0.0
    %1146 = vmatpush1.msra.mxu0 0.0
    %1147 = vmatprep.subr.mxu0 0.0
    %1148 = vmatpush1.msra.mxu0 0.0
    %1149 = vmatprep.subr.mxu0 0.0
    %1150 = vmatpush1.msra.mxu0 0.0
    %1151 = vmatprep.subr.mxu0 0.0
    %1152 = vmatpush1.msra.mxu0 0.0
    %1153 = vmatprep.subr.mxu0 0.0
    %1154 = vmatpush1.msra.mxu0 0.0
    %1155 = vmatprep.subr.mxu0 0.0
    %1156 = vmatpush1.msra.mxu0 0.0
    %1157 = vmatprep.subr.mxu0 0.0
    %1158 = vmatpush1.msra.mxu0 0.0
    %1159 = vmatprep.subr.mxu0 0.0
    %1160 = vmatpush1.msra.mxu0 0.0
    %1161 = vmatprep.subr.mxu0 0.0
    %1162 = vmatpush1.msra.mxu0 0.0
    %1163 = vmatprep.subr.mxu0 0.0
    %1164 = vmatpush1.msra.mxu0 0.0
    %1165 = vmatprep.subr.mxu0 0.0
    %1166 = vmatpush1.msra.mxu0 0.0
    %1167 = vmatprep.subr.mxu0 0.0
    %1168 = vmatpush1.msra.mxu0 0.0
    %1169 = vmatprep.subr.mxu0 0.0
    %1170 = vmatpush1.msra.mxu0 0.0
    %1171 = vmatprep.subr.mxu0 0.0
    %1172 = vmatpush1.msra.mxu0 0.0
    %1173 = vmatprep.subr.mxu0 0.0
    %1174 = vmatpush1.msra.mxu0 0.0
    %1175 = vmatprep.subr.mxu0 0.0
    %1176 = vmatpush1.msra.mxu0 0.0
    %1177 = vmatprep.mubr.f32.mxu0 0.0
    %1178 = vmatmul.mubr.f32.gmra.mrb[0].mxu0 %v722
    %v1179 = vpop.f32.mrb[0].mxu0
    %v1180 = vadd.f32 0.0, %v1179
    %v1181 = vpop.f32.mrb[0].mxu0
    %1182 = vmatprep.mubr.f32.mxu0 0.0
    %1183 = vmatmul.mubr.f32.gmra.mrb[0].mxu0 %v725
    %v1184 = vpop.f32.mrb[0].mxu0
    %v1185 = vadd.f32 0.0, %v1184
    %v1186 = vpop.f32.mrb[0].mxu0
    %1187 = vmatprep.mubr.f32.mxu0 0.0
    %1188 = vmatmul.mubr.f32.gmra.mrb[0].mxu0 %v728
    %v1189 = vpop.f32.mrb[0].mxu0
    %v1190 = vadd.f32 0.0, %v1189
    %v1191 = vpop.f32.mrb[0].mxu0
    %1192 = vmatprep.mubr.f32.mxu0 0.0
    %1193 = vmatmul.mubr.f32.gmra.mrb[0].mxu0 %v731
    %v1194 = vpop.f32.mrb[0].mxu0
    %v1195 = vadd.f32 0.0, %v1194
    %v1196 = vpop.f32.mrb[0].mxu0
    %1197 = vdwg.mxu0
    %v1198 = vadd.f32 %v996, %v1180
    %v1199 = vadd.f32 %v997, %v1185
    %v1200 = vadd.f32 %v998, %v1190
    %v1201 = vadd.f32 %v999, %v1195
    %1202 = vmatprep.subr.mxu0 0.0
    %1203 = vmatpush1.msra.mxu0 %v45
    %1204 = vmatprep.subr.mxu0 0.0
    %1205 = vmatpush1.msra.mxu0 %v46
    %1206 = vmatprep.subr.mxu0 0.0
    %1207 = vmatpush1.msra.mxu0 %v47
    %1208 = vmatprep.subr.mxu0 0.0
    %1209 = vmatpush1.msra.mxu0 %v48
    %1210 = vmatprep.subr.mxu0 0.0
    %1211 = vmatpush1.msra.mxu0 %v49
    %1212 = vmatprep.subr.mxu0 0.0
    %1213 = vmatpush1.msra.mxu0 %v50
    %1214 = vmatprep.subr.mxu0 0.0
    %1215 = vmatpush1.msra.mxu0 %v51
    %1216 = vmatprep.subr.mxu0 0.0
    %1217 = vmatpush1.msra.mxu0 %v52
    %1218 = vmatprep.subr.mxu0 0.0
    %1219 = vmatpush1.msra.mxu0 %v53
    %1220 = vmatprep.subr.mxu0 0.0
    %1221 = vmatpush1.msra.mxu0 %v54
    %1222 = vmatprep.subr.mxu0 0.0
    %1223 = vmatpush1.msra.mxu0 %v55
    %1224 = vmatprep.subr.mxu0 0.0
    %1225 = vmatpush1.msra.mxu0 %v56
    %1226 = vmatprep.subr.mxu0 0.0
    %1227 = vmatpush1.msra.mxu0 %v57
    %1228 = vmatprep.subr.mxu0 0.0
    %1229 = vmatpush1.msra.mxu0 %v58
    %1230 = vmatprep.subr.mxu0 0.0
    %1231 = vmatpush1.msra.mxu0 %v59
    %1232 = vmatprep.subr.mxu0 0.0
    %1233 = vmatpush1.msra.mxu0 %v60
    %1234 = vmatprep.subr.mxu0 0.0
    %1235 = vmatpush1.msra.mxu0 0.0
    %1236 = vmatprep.subr.mxu0 0.0
    %1237 = vmatpush1.msra.mxu0 0.0
    %1238 = vmatprep.subr.mxu0 0.0
    %1239 = vmatpush1.msra.mxu0 0.0
    %1240 = vmatprep.subr.mxu0 0.0
    %1241 = vmatpush1.msra.mxu0 0.0
    %1242 = vmatprep.subr.mxu0 0.0
    %1243 = vmatpush1.msra.mxu0 0.0
    %1244 = vmatprep.subr.mxu0 0.0
    %1245 = vmatpush1.msra.mxu0 0.0
    %1246 = vmatprep.subr.mxu0 0.0
    %1247 = vmatpush1.msra.mxu0 0.0
    %1248 = vmatprep.subr.mxu0 0.0
    %1249 = vmatpush1.msra.mxu0 0.0
    %1250 = vmatprep.subr.mxu0 0.0
    %1251 = vmatpush1.msra.mxu0 0.0
    %1252 = vmatprep.subr.mxu0 0.0
    %1253 = vmatpush1.msra.mxu0 0.0
    %1254 = vmatprep.subr.mxu0 0.0
    %1255 = vmatpush1.msra.mxu0 0.0
    %1256 = vmatprep.subr.mxu0 0.0
    %1257 = vmatpush1.msra.mxu0 0.0
    %1258 = vmatprep.subr.mxu0 0.0
    %1259 = vmatpush1.msra.mxu0 0.0
    %1260 = vmatprep.subr.mxu0 0.0
    %1261 = vmatpush1.msra.mxu0 0.0
    %1262 = vmatprep.subr.mxu0 0.0
    %1263 = vmatpush1.msra.mxu0 0.0
    %1264 = vmatprep.subr.mxu0 0.0
    %1265 = vmatpush1.msra.mxu0 0.0
    %1266 = vmatprep.mubr.f32.mxu0 0.0
    %1267 = vmatmul.mubr.f32.gmra.mrb[0].mxu0 %v1198
    %v1268 = vpop.f32.mrb[0].mxu0
    %v1269 = vadd.f32 %v104, %v1268
    %v1270 = vpop.f32.mrb[0].mxu0
    %1271 = vmatprep.mubr.f32.mxu0 0.0
    %1272 = vmatmul.mubr.f32.gmra.mrb[0].mxu0 %v1199
    %v1273 = vpop.f32.mrb[0].mxu0
    %v1274 = vadd.f32 %v104, %v1273
    %v1275 = vpop.f32.mrb[0].mxu0
    %1276 = vmatprep.mubr.f32.mxu0 0.0
    %1277 = vmatmul.mubr.f32.gmra.mrb[0].mxu0 %v1200
    %v1278 = vpop.f32.mrb[0].mxu0
    %v1279 = vadd.f32 %v104, %v1278
    %v1280 = vpop.f32.mrb[0].mxu0
    %1281 = vmatprep.mubr.f32.mxu0 0.0
    %1282 = vmatmul.mubr.f32.gmra.mrb[0].mxu0 %v1201
    %v1283 = vpop.f32.mrb[0].mxu0
    %v1284 = vadd.f32 %v104, %v1283
    %v1285 = vpop.f32.mrb[0].mxu0
    %1286 = vdwg.mxu0
    %v1287 = vmax.f32 %v1269, 0.0
    %v1288 = vmax.f32 %v1274, 0.0
    %v1289 = vmax.f32 %v1279, 0.0
    %v1290 = vmax.f32 %v1284, 0.0
    %1291 = vmatprep.subr.mxu0 0.0
    %1292 = vmatpush1.msra.mxu0 %v61
    %1293 = vmatprep.subr.mxu0 0.0
    %1294 = vmatpush1.msra.mxu0 %v62
    %1295 = vmatprep.subr.mxu0 0.0
    %1296 = vmatpush1.msra.mxu0 %v63
    %1297 = vmatprep.subr.mxu0 0.0
    %1298 = vmatpush1.msra.mxu0 %v64
    %1299 = vmatprep.subr.mxu0 0.0
    %1300 = vmatpush1.msra.mxu0 %v65
    %1301 = vmatprep.subr.mxu0 0.0
    %1302 = vmatpush1.msra.mxu0 %v66
    %1303 = vmatprep.subr.mxu0 0.0
    %1304 = vmatpush1.msra.mxu0 %v67
    %1305 = vmatprep.subr.mxu0 0.0
    %1306 = vmatpush1.msra.mxu0 %v68
    %1307 = vmatprep.subr.mxu0 0.0
    %1308 = vmatpush1.msra.mxu0 %v69
    %1309 = vmatprep.subr.mxu0 0.0
    %1310 = vmatpush1.msra.mxu0 %v70
    %1311 = vmatprep.subr.mxu0 0.0
    %1312 = vmatpush1.msra.mxu0 %v71
    %1313 = vmatprep.subr.mxu0 0.0
    %1314 = vmatpush1.msra.mxu0 %v72
    %1315 = vmatprep.subr.mxu0 0.0
    %1316 = vmatpush1.msra.mxu0 %v73
    %1317 = vmatprep.subr.mxu0 0.0
    %1318 = vmatpush1.msra.mxu0 %v74
    %1319 = vmatprep.subr.mxu0 0.0
    %1320 = vmatpush1.msra.mxu0 %v75
    %1321 = vmatprep.subr.mxu0 0.0
    %1322 = vmatpush1.msra.mxu0 %v76
    %1323 = vmatprep.subr.mxu0 0.0
    %1324 = vmatpush1.msra.mxu0 0.0
    %1325 = vmatprep.subr.mxu0 0.0
    %1326 = vmatpush1.msra.mxu0 0.0
    %1327 = vmatprep.subr.mxu0 0.0
    %1328 = vmatpush1.msra.mxu0 0.0
    %1329 = vmatprep.subr.mxu0 0.0
    %1330 = vmatpush1.msra.mxu0 0.0
    %1331 = vmatprep.subr.mxu0 0.0
    %1332 = vmatpush1.msra.mxu0 0.0
    %1333 = vmatprep.subr.mxu0 0.0
    %1334 = vmatpush1.msra.mxu0 0.0
    %1335 = vmatprep.subr.mxu0 0.0
    %1336 = vmatpush1.msra.mxu0 0.0
    %1337 = vmatprep.subr.mxu0 0.0
    %1338 = vmatpush1.msra.mxu0 0.0
    %1339 = vmatprep.subr.mxu0 0.0
    %1340 = vmatpush1.msra.mxu0 0.0
    %1341 = vmatprep.subr.mxu0 0.0
    %1342 = vmatpush1.msra.mxu0 0.0
    %1343 = vmatprep.subr.mxu0 0.0
    %1344 = vmatpush1.msra.mxu0 0.0
    %1345 = vmatprep.subr.mxu0 0.0
    %1346 = vmatpush1.msra.mxu0 0.0
    %1347 = vmatprep.subr.mxu0 0.0
    %1348 = vmatpush1.msra.mxu0 0.0
    %1349 = vmatprep.subr.mxu0 0.0
    %1350 = vmatpush1.msra.mxu0 0.0
    %1351 = vmatprep.subr.mxu0 0.0
    %1352 = vmatpush1.msra.mxu0 0.0
    %1353 = vmatprep.subr.mxu0 0.0
    %1354 = vmatpush1.msra.mxu0 0.0
    %1355 = vmatprep.mubr.f32.mxu0 0.0
    %1356 = vmatmul.mubr.f32.gmra.mrb[0].mxu0 %v1287
    %v1357 = vpop.f32.mrb[0].mxu0
    %v1358 = vadd.f32 %v110, %v1357
    %v1359 = vpop.f32.mrb[0].mxu0
    %1360 = vmatprep.mubr.f32.mxu0 0.0
    %1361 = vmatmul.mubr.f32.gmra.mrb[0].mxu0 %v1288
    %v1362 = vpop.f32.mrb[0].mxu0
    %v1363 = vadd.f32 %v110, %v1362
    %v1364 = vpop.f32.mrb[0].mxu0
    %1365 = vmatprep.mubr.f32.mxu0 0.0
    %1366 = vmatmul.mubr.f32.gmra.mrb[0].mxu0 %v1289
    %v1367 = vpop.f32.mrb[0].mxu0
    %v1368 = vadd.f32 %v110, %v1367
    %v1369 = vpop.f32.mrb[0].mxu0
    %1370 = vmatprep.mubr.f32.mxu0 0.0
    %1371 = vmatmul.mubr.f32.gmra.mrb[0].mxu0 %v1290
    %v1372 = vpop.f32.mrb[0].mxu0
    %v1373 = vadd.f32 %v110, %v1372
    %v1374 = vpop.f32.mrb[0].mxu0
    %1375 = vdwg.mxu0
    %v1376 = vmax.f32 %v1358, 0.0
    %v1377 = vmax.f32 %v1363, 0.0
    %v1378 = vmax.f32 %v1368, 0.0
    %v1379 = vmax.f32 %v1373, 0.0
    %1380 = vmatprep.subr.mxu0 0.0
    %1381 = vmatpush1.msra.mxu0 %v1376
    %1382 = vmatprep.subr.mxu0 0.0
    %1383 = vmatpush1.msra.mxu0 %v1377
    %1384 = vmatprep.subr.mxu0 0.0
    %1385 = vmatpush1.msra.mxu0 %v1378
    %1386 = vmatprep.subr.mxu0 0.0
    %1387 = vmatpush1.msra.mxu0 %v1379
    %1388 = vmatprep.subr.mxu0 0.0
    %1389 = vmatpush1.msra.mxu0 0.0
    %1390 = vmatprep.subr.mxu0 0.0
    %1391 = vmatpush1.msra.mxu0 0.0
    %1392 = vmatprep.subr.mxu0 0.0
    %1393 = vmatpush1.msra.mxu0 0.0
    %1394 = vmatprep.subr.mxu0 0.0
    %1395 = vmatpush1.msra.mxu0 0.0
    %1396 = vmatprep.subr.mxu0 0.0
    %1397 = vmatpush1.msra.mxu0 0.0
    %1398 = vmatprep.subr.mxu0 0.0
    %1399 = vmatpush1.msra.mxu0 0.0
    %1400 = vmatprep.subr.mxu0 0.0
    %1401 = vmatpush1.msra.mxu0 0.0
    %1402 = vmatprep.subr.mxu0 0.0
    %1403 = vmatpush1.msra.mxu0 0.0
    %1404 = vmatprep.subr.mxu0 0.0
    %1405 = vmatpush1.msra.mxu0 0.0
    %1406 = vmatprep.subr.mxu0 0.0
    %1407 = vmatpush1.msra.mxu0 0.0
    %1408 = vmatprep.subr.mxu0 0.0
    %1409 = vmatpush1.msra.mxu0 0.0
    %1410 = vmatprep.subr.mxu0 0.0
    %1411 = vmatpush1.msra.mxu0 0.0
    %1412 = vmatprep.subr.mxu0 0.0
    %1413 = vmatpush1.msra.mxu0 0.0
    %1414 = vmatprep.subr.mxu0 0.0
    %1415 = vmatpush1.msra.mxu0 0.0
    %1416 = vmatprep.subr.mxu0 0.0
    %1417 = vmatpush1.msra.mxu0 0.0
    %1418 = vmatprep.subr.mxu0 0.0
    %1419 = vmatpush1.msra.mxu0 0.0
    %1420 = vmatprep.subr.mxu0 0.0
    %1421 = vmatpush1.msra.mxu0 0.0
    %1422 = vmatprep.subr.mxu0 0.0
    %1423 = vmatpush1.msra.mxu0 0.0
    %1424 = vmatprep.subr.mxu0 0.0
    %1425 = vmatpush1.msra.mxu0 0.0
    %1426 = vmatprep.subr.mxu0 0.0
    %1427 = vmatpush1.msra.mxu0 0.0
    %1428 = vmatprep.subr.mxu0 0.0
    %1429 = vmatpush1.msra.mxu0 0.0
    %1430 = vmatprep.subr.mxu0 0.0
    %1431 = vmatpush1.msra.mxu0 0.0
    %1432 = vmatprep.subr.mxu0 0.0
    %1433 = vmatpush1.msra.mxu0 0.0
    %1434 = vmatprep.subr.mxu0 0.0
    %1435 = vmatpush1.msra.mxu0 0.0
    %1436 = vmatprep.subr.mxu0 0.0
    %1437 = vmatpush1.msra.mxu0 0.0
    %1438 = vmatprep.subr.mxu0 0.0
    %1439 = vmatpush1.msra.mxu0 0.0
    %1440 = vmatprep.subr.mxu0 0.0
    %1441 = vmatpush1.msra.mxu0 0.0
    %1442 = vmatprep.subr.mxu0 0.0
    %1443 = vmatpush1.msra.mxu0 0.0
    %1444 = vmatprep.mubr.f32.mxu0 0.0
    %1445 = vmatmul.mubr.f32.gmra.mrb[0].mxu0 %v584
    %v1446 = vpop.f32.mrb[0].mxu0
    %v1447 = vadd.f32 %v544, %v1446
    %v1448 = vpop.f32.mrb[0].mxu0
    %1449 = vmatprep.mubr.f32.mxu0 0.0
    %1450 = vmatmul.mubr.f32.gmra.mrb[0].mxu0 %v587
    %v1451 = vpop.f32.mrb[0].mxu0
    %v1452 = vadd.f32 %v549, %v1451
    %v1453 = vpop.f32.mrb[0].mxu0
    %1454 = vmatprep.mubr.f32.mxu0 0.0
    %1455 = vmatmul.mubr.f32.gmra.mrb[0].mxu0 %v590
    %v1456 = vpop.f32.mrb[0].mxu0
    %v1457 = vadd.f32 %v554, %v1456
    %v1458 = vpop.f32.mrb[0].mxu0
    %1459 = vmatprep.mubr.f32.mxu0 0.0
    %1460 = vmatmul.mubr.f32.gmra.mrb[0].mxu0 %v593
    %v1461 = vpop.f32.mrb[0].mxu0
    %v1462 = vadd.f32 %v559, %v1461
    %v1463 = vpop.f32.mrb[0].mxu0
    %1464 = vmatprep.mubr.f32.mxu0 0.0
    %1465 = vmatmul.mubr.f32.gmra.mrb[0].mxu0 %v596
    %v1466 = vpop.f32.mrb[0].mxu0
    %v1467 = vadd.f32 %v564, %v1466
    %v1468 = vpop.f32.mrb[0].mxu0
    %1469 = vmatprep.mubr.f32.mxu0 0.0
    %1470 = vmatmul.mubr.f32.gmra.mrb[0].mxu0 %v599
    %v1471 = vpop.f32.mrb[0].mxu0
    %v1472 = vadd.f32 %v569, %v1471
    %v1473 = vpop.f32.mrb[0].mxu0
    %1474 = vmatprep.mubr.f32.mxu0 0.0
    %1475 = vmatmul.mubr.f32.gmra.mrb[0].mxu0 %v602
    %v1476 = vpop.f32.mrb[0].mxu0
    %v1477 = vadd.f32 %v574, %v1476
    %v1478 = vpop.f32.mrb[0].mxu0
    %1479 = vmatprep.mubr.f32.mxu0 0.0
    %1480 = vmatmul.mubr.f32.gmra.mrb[0].mxu0 %v605
    %v1481 = vpop.f32.mrb[0].mxu0
    %v1482 = vadd.f32 %v579, %v1481
    %v1483 = vpop.f32.mrb[0].mxu0
    %1484 = vdwg.mxu0
    %v1485 = vmax.f32 %v1447, 0.0
    %v1486 = vmax.f32 %v1452, 0.0
    %v1487 = vmax.f32 %v1457, 0.0
    %v1488 = vmax.f32 %v1462, 0.0
    %v1489 = vmax.f32 %v1467, 0.0
    %v1490 = vmax.f32 %v1472, 0.0
    %v1491 = vmax.f32 %v1477, 0.0
    %v1492 = vmax.f32 %v1482, 0.0
    %1493 = vmatprep.subr.mxu0 0.0
    %1494 = vmatpush1.msra.mxu0 %v1485
    %1495 = vmatprep.subr.mxu0 0.0
    %1496 = vmatpush1.msra.mxu0 %v1486
    %1497 = vmatprep.subr.mxu0 0.0
    %1498 = vmatpush1.msra.mxu0 %v1487
    %1499 = vmatprep.subr.mxu0 0.0
    %1500 = vmatpush1.msra.mxu0 %v1488
    %1501 = vmatprep.subr.mxu0 0.0
    %1502 = vmatpush1.msra.mxu0 %v1489
    %1503 = vmatprep.subr.mxu0 0.0
    %1504 = vmatpush1.msra.mxu0 %v1490
    %1505 = vmatprep.subr.mxu0 0.0
    %1506 = vmatpush1.msra.mxu0 %v1491
    %1507 = vmatprep.subr.mxu0 0.0
    %1508 = vmatpush1.msra.mxu0 %v1492
    %1509 = vmatprep.subr.mxu0 0.0
    %1510 = vmatpush1.msra.mxu0 0.0
    %1511 = vmatprep.subr.mxu0 0.0
    %1512 = vmatpush1.msra.mxu0 0.0
    %1513 = vmatprep.subr.mxu0 0.0
    %1514 = vmatpush1.msra.mxu0 0.0
    %1515 = vmatprep.subr.mxu0 0.0
    %1516 = vmatpush1.msra.mxu0 0.0
    %1517 = vmatprep.subr.mxu0 0.0
    %1518 = vmatpush1.msra.mxu0 0.0
    %1519 = vmatprep.subr.mxu0 0.0
    %1520 = vmatpush1.msra.mxu0 0.0
    %1521 = vmatprep.subr.mxu0 0.0
    %1522 = vmatpush1.msra.mxu0 0.0
    %1523 = vmatprep.subr.mxu0 0.0
    %1524 = vmatpush1.msra.mxu0 0.0
    %1525 = vmatprep.subr.mxu0 0.0
    %1526 = vmatpush1.msra.mxu0 0.0
    %1527 = vmatprep.subr.mxu0 0.0
    %1528 = vmatpush1.msra.mxu0 0.0
    %1529 = vmatprep.subr.mxu0 0.0
    %1530 = vmatpush1.msra.mxu0 0.0
    %1531 = vmatprep.subr.mxu0 0.0
    %1532 = vmatpush1.msra.mxu0 0.0
    %1533 = vmatprep.subr.mxu0 0.0
    %1534 = vmatpush1.msra.mxu0 0.0
    %1535 = vmatprep.subr.mxu0 0.0
    %1536 = vmatpush1.msra.mxu0 0.0
    %1537 = vmatprep.subr.mxu0 0.0
    %1538 = vmatpush1.msra.mxu0 0.0
    %1539 = vmatprep.subr.mxu0 0.0
    %1540 = vmatpush1.msra.mxu0 0.0
    %1541 = vmatprep.subr.mxu0 0.0
    %1542 = vmatpush1.msra.mxu0 0.0
    %1543 = vmatprep.subr.mxu0 0.0
    %1544 = vmatpush1.msra.mxu0 0.0
    %1545 = vmatprep.subr.mxu0 0.0
    %1546 = vmatpush1.msra.mxu0 0.0
    %1547 = vmatprep.subr.mxu0 0.0
    %1548 = vmatpush1.msra.mxu0 0.0
    %1549 = vmatprep.subr.mxu0 0.0
    %1550 = vmatpush1.msra.mxu0 0.0
    %1551 = vmatprep.subr.mxu0 0.0
    %1552 = vmatpush1.msra.mxu0 0.0
    %1553 = vmatprep.subr.mxu0 0.0
    %1554 = vmatpush1.msra.mxu0 0.0
    %1555 = vmatprep.subr.mxu0 0.0
    %1556 = vmatpush1.msra.mxu0 0.0
    %1557 = vmatprep.mubr.f32.mxu0 0.0
    %1558 = vmatmul.mubr.f32.gmra.mrb[0].mxu0 %v722
    %v1559 = vpop.f32.mrb[0].mxu0
    %v1560 = vadd.f32 0.0, %v1559
    %v1561 = vpop.f32.mrb[0].mxu0
    %1562 = vmatprep.mubr.f32.mxu0 0.0
    %1563 = vmatmul.mubr.f32.gmra.mrb[0].mxu0 %v725
    %v1564 = vpop.f32.mrb[0].mxu0
    %v1565 = vadd.f32 0.0, %v1564
    %v1566 = vpop.f32.mrb[0].mxu0
    %1567 = vmatprep.mubr.f32.mxu0 0.0
    %1568 = vmatmul.mubr.f32.gmra.mrb[0].mxu0 %v728
    %v1569 = vpop.f32.mrb[0].mxu0
    %v1570 = vadd.f32 0.0, %v1569
    %v1571 = vpop.f32.mrb[0].mxu0
    %1572 = vmatprep.mubr.f32.mxu0 0.0
    %1573 = vmatmul.mubr.f32.gmra.mrb[0].mxu0 %v731
    %v1574 = vpop.f32.mrb[0].mxu0
    %v1575 = vadd.f32 0.0, %v1574
    %v1576 = vpop.f32.mrb[0].mxu0
    %1577 = vdwg.mxu0
    %v1578 = vadd.f32 %v1376, %v1560
    %v1579 = vadd.f32 %v1377, %v1565
    %v1580 = vadd.f32 %v1378, %v1570
    %v1581 = vadd.f32 %v1379, %v1575
    %1582 = vmatprep.subr.mxu0 0.0
    %1583 = vmatpush1.msra.mxu0 %v45
    %1584 = vmatprep.subr.mxu0 0.0
    %1585 = vmatpush1.msra.mxu0 %v46
    %1586 = vmatprep.subr.mxu0 0.0
    %1587 = vmatpush1.msra.mxu0 %v47
    %1588 = vmatprep.subr.mxu0 0.0
    %1589 = vmatpush1.msra.mxu0 %v48
    %1590 = vmatprep.subr.mxu0 0.0
    %1591 = vmatpush1.msra.mxu0 %v49
    %1592 = vmatprep.subr.mxu0 0.0
    %1593 = vmatpush1.msra.mxu0 %v50
    %1594 = vmatprep.subr.mxu0 0.0
    %1595 = vmatpush1.msra.mxu0 %v51
    %1596 = vmatprep.subr.mxu0 0.0
    %1597 = vmatpush1.msra.mxu0 %v52
    %1598 = vmatprep.subr.mxu0 0.0
    %1599 = vmatpush1.msra.mxu0 %v53
    %1600 = vmatprep.subr.mxu0 0.0
    %1601 = vmatpush1.msra.mxu0 %v54
    %1602 = vmatprep.subr.mxu0 0.0
    %1603 = vmatpush1.msra.mxu0 %v55
    %1604 = vmatprep.subr.mxu0 0.0
    %1605 = vmatpush1.msra.mxu0 %v56
    %1606 = vmatprep.subr.mxu0 0.0
    %1607 = vmatpush1.msra.mxu0 %v57
    %1608 = vmatprep.subr.mxu0 0.0
    %1609 = vmatpush1.msra.mxu0 %v58
    %1610 = vmatprep.subr.mxu0 0.0
    %1611 = vmatpush1.msra.mxu0 %v59
    %1612 = vmatprep.subr.mxu0 0.0
    %1613 = vmatpush1.msra.mxu0 %v60
    %1614 = vmatprep.subr.mxu0 0.0
    %1615 = vmatpush1.msra.mxu0 0.0
    %1616 = vmatprep.subr.mxu0 0.0
    %1617 = vmatpush1.msra.mxu0 0.0
    %1618 = vmatprep.subr.mxu0 0.0
    %1619 = vmatpush1.msra.mxu0 0.0
    %1620 = vmatprep.subr.mxu0 0.0
    %1621 = vmatpush1.msra.mxu0 0.0
    %1622 = vmatprep.subr.mxu0 0.0
    %1623 = vmatpush1.msra.mxu0 0.0
    %1624 = vmatprep.subr.mxu0 0.0
    %1625 = vmatpush1.msra.mxu0 0.0
    %1626 = vmatprep.subr.mxu0 0.0
    %1627 = vmatpush1.msra.mxu0 0.0
    %1628 = vmatprep.subr.mxu0 0.0
    %1629 = vmatpush1.msra.mxu0 0.0
    %1630 = vmatprep.subr.mxu0 0.0
    %1631 = vmatpush1.msra.mxu0 0.0
    %1632 = vmatprep.subr.mxu0 0.0
    %1633 = vmatpush1.msra.mxu0 0.0
    %1634 = vmatprep.subr.mxu0 0.0
    %1635 = vmatpush1.msra.mxu0 0.0
    %1636 = vmatprep.subr.mxu0 0.0
    %1637 = vmatpush1.msra.mxu0 0.0
    %1638 = vmatprep.subr.mxu0 0.0
    %1639 = vmatpush1.msra.mxu0 0.0
    %1640 = vmatprep.subr.mxu0 0.0
    %1641 = vmatpush1.msra.mxu0 0.0
    %1642 = vmatprep.subr.mxu0 0.0
    %1643 = vmatpush1.msra.mxu0 0.0
    %1644 = vmatprep.subr.mxu0 0.0
    %1645 = vmatpush1.msra.mxu0 0.0
    %1646 = vmatprep.mubr.f32.mxu0 0.0
    %1647 = vmatmul.mubr.f32.gmra.mrb[0].mxu0 %v1578
    %v1648 = vpop.f32.mrb[0].mxu0
    %v1649 = vadd.f32 %v104, %v1648
    %v1650 = vpop.f32.mrb[0].mxu0
    %1651 = vmatprep.mubr.f32.mxu0 0.0
    %1652 = vmatmul.mubr.f32.gmra.mrb[0].mxu0 %v1579
    %v1653 = vpop.f32.mrb[0].mxu0
    %v1654 = vadd.f32 %v104, %v1653
    %v1655 = vpop.f32.mrb[0].mxu0
    %1656 = vmatprep.mubr.f32.mxu0 0.0
    %1657 = vmatmul.mubr.f32.gmra.mrb[0].mxu0 %v1580
    %v1658 = vpop.f32.mrb[0].mxu0
    %v1659 = vadd.f32 %v104, %v1658
    %v1660 = vpop.f32.mrb[0].mxu0
    %1661 = vmatprep.mubr.f32.mxu0 0.0
    %1662 = vmatmul.mubr.f32.gmra.mrb[0].mxu0 %v1581
    %v1663 = vpop.f32.mrb[0].mxu0
    %v1664 = vadd.f32 %v104, %v1663
    %v1665 = vpop.f32.mrb[0].mxu0
    %1666 = vdwg.mxu0
    %v1667 = vmax.f32 %v1649, 0.0
    %v1668 = vmax.f32 %v1654, 0.0
    %v1669 = vmax.f32 %v1659, 0.0
    %v1670 = vmax.f32 %v1664, 0.0
    %1671 = vmatprep.subr.mxu0 0.0
    %1672 = vmatpush1.msra.mxu0 %v61
    %1673 = vmatprep.subr.mxu0 0.0
    %1674 = vmatpush1.msra.mxu0 %v62
    %1675 = vmatprep.subr.mxu0 0.0
    %1676 = vmatpush1.msra.mxu0 %v63
    %1677 = vmatprep.subr.mxu0 0.0
    %1678 = vmatpush1.msra.mxu0 %v64
    %1679 = vmatprep.subr.mxu0 0.0
    %1680 = vmatpush1.msra.mxu0 %v65
    %1681 = vmatprep.subr.mxu0 0.0
    %1682 = vmatpush1.msra.mxu0 %v66
    %1683 = vmatprep.subr.mxu0 0.0
    %1684 = vmatpush1.msra.mxu0 %v67
    %1685 = vmatprep.subr.mxu0 0.0
    %1686 = vmatpush1.msra.mxu0 %v68
    %1687 = vmatprep.subr.mxu0 0.0
    %1688 = vmatpush1.msra.mxu0 %v69
    %1689 = vmatprep.subr.mxu0 0.0
    %1690 = vmatpush1.msra.mxu0 %v70
    %1691 = vmatprep.subr.mxu0 0.0
    %1692 = vmatpush1.msra.mxu0 %v71
    %1693 = vmatprep.subr.mxu0 0.0
    %1694 = vmatpush1.msra.mxu0 %v72
    %1695 = vmatprep.subr.mxu0 0.0
    %1696 = vmatpush1.msra.mxu0 %v73
    %1697 = vmatprep.subr.mxu0 0.0
    %1698 = vmatpush1.msra.mxu0 %v74
    %1699 = vmatprep.subr.mxu0 0.0
    %1700 = vmatpush1.msra.mxu0 %v75
    %1701 = vmatprep.subr.mxu0 0.0
    %1702 = vmatpush1.msra.mxu0 %v76
    %1703 = vmatprep.subr.mxu0 0.0
    %1704 = vmatpush1.msra.mxu0 0.0
    %1705 = vmatprep.subr.mxu0 0.0
    %1706 = vmatpush1.msra.mxu0 0.0
    %1707 = vmatprep.subr.mxu0 0.0
    %1708 = vmatpush1.msra.mxu0 0.0
    %1709 = vmatprep.subr.mxu0 0.0
    %1710 = vmatpush1.msra.mxu0 0.0
    %1711 = vmatprep.subr.mxu0 0.0
    %1712 = vmatpush1.msra.mxu0 0.0
    %1713 = vmatprep.subr.mxu0 0.0
    %1714 = vmatpush1.msra.mxu0 0.0
    %1715 = vmatprep.subr.mxu0 0.0
    %1716 = vmatpush1.msra.mxu0 0.0
    %1717 = vmatprep.subr.mxu0 0.0
    %1718 = vmatpush1.msra.mxu0 0.0
    %1719 = vmatprep.subr.mxu0 0.0
    %1720 = vmatpush1.msra.mxu0 0.0
    %1721 = vmatprep.subr.mxu0 0.0
    %1722 = vmatpush1.msra.mxu0 0.0
    %1723 = vmatprep.subr.mxu0 0.0
    %1724 = vmatpush1.msra.mxu0 0.0
    %1725 = vmatprep.subr.mxu0 0.0
    %1726 = vmatpush1.msra.mxu0 0.0
    %1727 = vmatprep.subr.mxu0 0.0
    %1728 = vmatpush1.msra.mxu0 0.0
    %1729 = vmatprep.subr.mxu0 0.0
    %1730 = vmatpush1.msra.mxu0 0.0
    %1731 = vmatprep.subr.mxu0 0.0
    %1732 = vmatpush1.msra.mxu0 0.0
    %1733 = vmatprep.subr.mxu0 0.0
    %1734 = vmatpush1.msra.mxu0 0.0
    %1735 = vmatprep.mubr.f32.mxu0 0.0
    %1736 = vmatmul.mubr.f32.gmra.mrb[0].mxu0 %v1667
    %v1737 = vpop.f32.mrb[0].mxu0
    %v1738 = vadd.f32 %v110, %v1737
    %v1739 = vpop.f32.mrb[0].mxu0
    %1740 = vmatprep.mubr.f32.mxu0 0.0
    %1741 = vmatmul.mubr.f32.gmra.mrb[0].mxu0 %v1668
    %v1742 = vpop.f32.mrb[0].mxu0
    %v1743 = vadd.f32 %v110, %v1742
    %v1744 = vpop.f32.mrb[0].mxu0
    %1745 = vmatprep.mubr.f32.mxu0 0.0
    %1746 = vmatmul.mubr.f32.gmra.mrb[0].mxu0 %v1669
    %v1747 = vpop.f32.mrb[0].mxu0
    %v1748 = vadd.f32 %v110, %v1747
    %v1749 = vpop.f32.mrb[0].mxu0
    %1750 = vmatprep.mubr.f32.mxu0 0.0
    %1751 = vmatmul.mubr.f32.gmra.mrb[0].mxu0 %v1670
    %v1752 = vpop.f32.mrb[0].mxu0
    %v1753 = vadd.f32 %v110, %v1752
    %v1754 = vpop.f32.mrb[0].mxu0
    %1755 = vdwg.mxu0
    %v1756 = vmax.f32 %v1738, 0.0
    %v1757 = vmax.f32 %v1743, 0.0
    %v1758 = vmax.f32 %v1748, 0.0
    %v1759 = vmax.f32 %v1753, 0.0
    %v1761 = vsel %vm582, %v311, 0
    %1763 = vmatprep.subr.mxu0 0.0
    %1764 = vmatpush1.msra.mxu0 %v1756
    %1765 = vmatprep.subr.mxu0 0.0
    %1766 = vmatpush1.msra.mxu0 %v1757
    %1767 = vmatprep.subr.mxu0 0.0
    %1768 = vmatpush1.msra.mxu0 %v1758
    %1769 = vmatprep.subr.mxu0 0.0
    %1770 = vmatpush1.msra.mxu0 %v1759
    %1771 = vmatprep.subr.mxu0 0.0
    %1772 = vmatpush1.msra.mxu0 0.0
    %1773 = vmatprep.subr.mxu0 0.0
    %1774 = vmatpush1.msra.mxu0 0.0
    %1775 = vmatprep.subr.mxu0 0.0
    %1776 = vmatpush1.msra.mxu0 0.0
    %1777 = vmatprep.subr.mxu0 0.0
    %1778 = vmatpush1.msra.mxu0 0.0
    %1779 = vmatprep.subr.mxu0 0.0
    %1780 = vmatpush1.msra.mxu0 0.0
    %1781 = vmatprep.subr.mxu0 0.0
    %1782 = vmatpush1.msra.mxu0 0.0
    %1783 = vmatprep.subr.mxu0 0.0
    %1784 = vmatpush1.msra.mxu0 0.0
    %1785 = vmatprep.subr.mxu0 0.0
    %1786 = vmatpush1.msra.mxu0 0.0
    %1787 = vmatprep.subr.mxu0 0.0
    %1788 = vmatpush1.msra.mxu0 0.0
    %1789 = vmatprep.subr.mxu0 0.0
    %1790 = vmatpush1.msra.mxu0 0.0
    %1791 = vmatprep.subr.mxu0 0.0
    %1792 = vmatpush1.msra.mxu0 0.0
    %1793 = vmatprep.subr.mxu0 0.0
    %1794 = vmatpush1.msra.mxu0 0.0
    %1795 = vmatprep.subr.mxu0 0.0
    %1796 = vmatpush1.msra.mxu0 0.0
    %1797 = vmatprep.subr.mxu0 0.0
    %1798 = vmatpush1.msra.mxu0 0.0
    %1799 = vmatprep.subr.mxu0 0.0
    %1800 = vmatpush1.msra.mxu0 0.0
    %1801 = vmatprep.subr.mxu0 0.0
    %1802 = vmatpush1.msra.mxu0 0.0
    %1803 = vmatprep.subr.mxu0 0.0
    %1804 = vmatpush1.msra.mxu0 0.0
    %1805 = vmatprep.subr.mxu0 0.0
    %1806 = vmatpush1.msra.mxu0 0.0
    %1807 = vmatprep.subr.mxu0 0.0
    %1808 = vmatpush1.msra.mxu0 0.0
    %1809 = vmatprep.subr.mxu0 0.0
    %1810 = vmatpush1.msra.mxu0 0.0
    %1811 = vmatprep.subr.mxu0 0.0
    %1812 = vmatpush1.msra.mxu0 0.0
    %1813 = vmatprep.subr.mxu0 0.0
    %1814 = vmatpush1.msra.mxu0 0.0
    %1815 = vmatprep.subr.mxu0 0.0
    %1816 = vmatpush1.msra.mxu0 0.0
    %1817 = vmatprep.subr.mxu0 0.0
    %1818 = vmatpush1.msra.mxu0 0.0
    %1819 = vmatprep.subr.mxu0 0.0
    %1820 = vmatpush1.msra.mxu0 0.0
    %1821 = vmatprep.subr.mxu0 0.0
    %1822 = vmatpush1.msra.mxu0 0.0
    %1823 = vmatprep.subr.mxu0 0.0
    %1824 = vmatpush1.msra.mxu0 0.0
    %1825 = vmatprep.subr.mxu0 0.0
    %1826 = vmatpush1.msra.mxu0 0.0
    %1827 = vmatprep.mubr.f32.mxu0 0.0
    %1828 = vmatmul.mubr.f32.gmra.mrb[0].mxu0 %v1761
    %v1829 = vpop.f32.mrb[0].mxu0
    %v1830 = vadd.f32 0.0, %v1829
    %v1831 = vpop.f32.mrb[0].mxu0
    %1832 = vdwg.mxu0
    %v1834 = vlaneseq
    %v1835 = vshrl.u32 %v1834, 7
    %v1836 = vsub.s32 0, %v1835
    %v1837 = vrot.slane %v98, %v1836
    %1839 = vmatprep.subr.mxu0 0.0
    %1840 = vmatpush1.msra.mxu0 %v77
    %1841 = vmatprep.subr.mxu0 0.0
    %1842 = vmatpush1.msra.mxu0 %v78
    %1843 = vmatprep.subr.mxu0 0.0
    %1844 = vmatpush1.msra.mxu0 %v79
    %1845 = vmatprep.subr.mxu0 0.0
    %1846 = vmatpush1.msra.mxu0 %v80
    %1847 = vmatprep.subr.mxu0 0.0
    %1848 = vmatpush1.msra.mxu0 %v81
    %1849 = vmatprep.subr.mxu0 0.0
    %1850 = vmatpush1.msra.mxu0 %v82
    %1851 = vmatprep.subr.mxu0 0.0
    %1852 = vmatpush1.msra.mxu0 %v83
    %1853 = vmatprep.subr.mxu0 0.0
    %1854 = vmatpush1.msra.mxu0 %v84
    %1855 = vmatprep.subr.mxu0 0.0
    %1856 = vmatpush1.msra.mxu0 %v85
    %1857 = vmatprep.subr.mxu0 0.0
    %1858 = vmatpush1.msra.mxu0 %v86
    %1859 = vmatprep.subr.mxu0 0.0
    %1860 = vmatpush1.msra.mxu0 %v87
    %1861 = vmatprep.subr.mxu0 0.0
    %1862 = vmatpush1.msra.mxu0 %v88
    %1863 = vmatprep.subr.mxu0 0.0
    %1864 = vmatpush1.msra.mxu0 %v89
    %1865 = vmatprep.subr.mxu0 0.0
    %1866 = vmatpush1.msra.mxu0 %v90
    %1867 = vmatprep.subr.mxu0 0.0
    %1868 = vmatpush1.msra.mxu0 %v91
    %1869 = vmatprep.subr.mxu0 0.0
    %1870 = vmatpush1.msra.mxu0 %v92
    %1871 = vmatprep.subr.mxu0 0.0
    %1872 = vmatpush1.msra.mxu0 0.0
    %1873 = vmatprep.subr.mxu0 0.0
    %1874 = vmatpush1.msra.mxu0 0.0
    %1875 = vmatprep.subr.mxu0 0.0
    %1876 = vmatpush1.msra.mxu0 0.0
    %1877 = vmatprep.subr.mxu0 0.0
    %1878 = vmatpush1.msra.mxu0 0.0
    %1879 = vmatprep.subr.mxu0 0.0
    %1880 = vmatpush1.msra.mxu0 0.0
    %1881 = vmatprep.subr.mxu0 0.0
    %1882 = vmatpush1.msra.mxu0 0.0
    %1883 = vmatprep.subr.mxu0 0.0
    %1884 = vmatpush1.msra.mxu0 0.0
    %1885 = vmatprep.subr.mxu0 0.0
    %1886 = vmatpush1.msra.mxu0 0.0
    %1887 = vmatprep.subr.mxu0 0.0
    %1888 = vmatpush1.msra.mxu0 0.0
    %1889 = vmatprep.subr.mxu0 0.0
    %1890 = vmatpush1.msra.mxu0 0.0
    %1891 = vmatprep.subr.mxu0 0.0
    %1892 = vmatpush1.msra.mxu0 0.0
    %1893 = vmatprep.subr.mxu0 0.0
    %1894 = vmatpush1.msra.mxu0 0.0
    %1895 = vmatprep.subr.mxu0 0.0
    %1896 = vmatpush1.msra.mxu0 0.0
    %1897 = vmatprep.subr.mxu0 0.0
    %1898 = vmatpush1.msra.mxu0 0.0
    %1899 = vmatprep.subr.mxu0 0.0
    %1900 = vmatpush1.msra.mxu0 0.0
    %1901 = vmatprep.subr.mxu0 0.0
    %1902 = vmatpush1.msra.mxu0 0.0
    %1903 = vmatprep.mubr.f32.mxu0 0.0
    %1904 = vmatmul.mubr.f32.gmra.mrb[0].mxu0 %v1830
    %v1905 = vpop.f32.mrb[0].mxu0
    %v1906 = vadd.f32 %v1837, %v1905
    %v1907 = vpop.f32.mrb[0].mxu0
    %1908 = vdwg.mxu0
    %v1909 = vmax.f32 %v1906, 0.0
    %v1910 = vlaneseq
    %v1911 = vshrl.u32 %v1910, 7
    %v1912 = vsub.s32 0, %v1911
    %v1913 = vrot.slane %v93, %v1912
    %v1914 = vmul.f32 %v1909, %v1913
    %vm1915 = vcmask 1041408
    %v1916 = vsel %vm1915, %v1914, 0.0
    %1917 = vadd.xlane.f32.xlu0 %v1916
    %v1918 = vpop.xlane.xlu0 %1917
    %v1920 = vlaneseq
    %v1921 = vshrl.u32 %v1920, 7
    %v1922 = vsub.s32 0, %v1921
    %v1923 = vrot.slane %v99, %v1922
    %v1925 = vadd.f32 %v1918, %v1923
    %vm1926 = vcmask 1024
    %1927 = vst.msk [vmem:[%s8] sm:$0x3] %vm1926, %v1925
    // Predicated region
    $region38: #{tpu_custom_call.1} parent=1 // pred_check
      _
    $region39: #{tpu_custom_call.1} parent=1 // pred_check_branch
      %1929 = sbr.rel (0) target = $region41
    $region40: #{tpu_custom_call.1} parent=1 // pred_region
      _
    $region41: #{tpu_custom_call.1} parent=1 // pred_fallthru
      _
    // Predicated region
    $region42: #{tpu_custom_call.1} parent=1 // pred_check
      _
    $region43: #{tpu_custom_call.1} parent=1 // pred_check_branch
      %1931 = sbr.rel (0) target = $region45
    $region44: #{tpu_custom_call.1} parent=1 // pred_region
      _
    $region45: #{tpu_custom_call.1} parent=1 // pred_fallthru
      _
    %1932 = vsyncpa [#allocation3], 1

</llo_original>
